<compile_context>
chip_gen: v7x
topology: tpu7x:2x2x1
jax: 0.10.0
libtpu: 0.0.40
codegen_flags: <defaults>
</compile_context>

<pallas_src>
import functools

import jax
import jax.numpy as jnp
from jax.experimental import pallas as pl
from jax.experimental.pallas import tpu as pltpu

EPS = 1e-6
# Keep comfortably under v7x's 64 MiB/TC while still allowing large tiles on
# v5e/v6e (128 MiB).
VMEM_LIMIT_BYTES = 48 * 1024 * 1024


def _round_up(x, m):
    return ((x + m - 1) // m) * m


def _row_multiple(dtype):
    # bf16/f16 pack two rows per sublane -> native (16, 128) tile.
    return 16 if jnp.dtype(dtype).itemsize == 2 else 8


def _pick_head_group(n_heads, d_kv, target_lanes=256):
    """Largest divisor of n_heads with group*d_kv <= target_lanes (>=1)."""
    g = max(1, min(n_heads, target_lanes // max(d_kv, 1)))
    while n_heads % g:
        g -= 1
    return g


# --------------------------------------------------------------------------
# Kernel 1: K/V projection of the encoder states for one head group.
#   kv_ref  : (1, kvt, d_model)       wkv_ref : (1, d_model, 2*G*d_kv)
#   k_out   : (1, 1, kvt, G*d_kv)     v_out   : (1, 1, kvt, G*d_kv)
# One wide matmul produces K|V for all G heads of the group; lane-dense store.
# --------------------------------------------------------------------------
def _kv_proj_kernel(kv_ref, wkv_ref, k_out_ref, v_out_ref, *, group_width):
    x = kv_ref[0].astype(wkv_ref.dtype)                       # (kvt, dm)
    res = jnp.dot(x, wkv_ref[0], preferred_element_type=jnp.float32)
    k_out_ref[0, 0] = res[:, :group_width].astype(k_out_ref.dtype)
    v_out_ref[0, 0] = res[:, group_width:].astype(v_out_ref.dtype)


# --------------------------------------------------------------------------
# Kernel 2: fused RMSNorm + Q proj + attention + output proj + residual.
# Grid = (batch, query_tiles, head_groups); the head-group axis (last,
# "arbitrary") is a reduction accumulating the output projection into acc_ref.
#   h_ref   : (1, tq, d_model)        wln_ref : (1, d_model)
#   wq_ref  : (1, d_model, G*d_kv)    k_ref/v_ref : (1, 1, Lk, G*d_kv)
#   wo_ref  : (1, G*d_kv, d_model)    out_ref : (1, tq, d_model)
#   normed_ref : (tq, d_model) mm_dtype scratch (hoisted RMSNorm)
#   acc_ref    : (tq, d_model) f32 scratch (residual + out-proj accumulator)
# --------------------------------------------------------------------------
def _cross_attn_kernel(h_ref, wln_ref, wq_ref, k_ref, v_ref, wo_ref,
                       out_ref, normed_ref, acc_ref, *, group, d_kv):
    g = pl.program_id(2)
    mm_dtype = wq_ref.dtype                                    # bf16 fast / f32
    exact = jnp.dtype(mm_dtype) == jnp.dtype(jnp.float32)

    @pl.when(g == 0)
    def _():
        # RMSNorm once per (batch, query tile); residual folded into acc.
        x = h_ref[0].astype(jnp.float32)                       # (tq, dm)
        var = jnp.mean(x * x, axis=-1, keepdims=True)
        normed = wln_ref[...].astype(jnp.float32) * (x * jax.lax.rsqrt(var + EPS))
        normed_ref[...] = normed.astype(mm_dtype)
        acc_ref[...] = x                                       # residual

    # --- group-wide Q projection (256-lane-wide operand) -------------------
    q = jnp.dot(normed_ref[...], wq_ref[0],
                preferred_element_type=jnp.float32).astype(mm_dtype)  # (tq, G*dk)

    k = k_ref[0, 0]                                            # (Lk, G*dk)
    v = v_ref[0, 0]                                            # (Lk, G*dk)

    # --- per-head attention within the group --------------------------------
    ctx_parts = []
    for h in range(group):
        sl = slice(h * d_kv, (h + 1) * d_kv)
        # scores = q_h @ k_h^T  (T5 has no 1/sqrt(dk) scaling)
        s = jax.lax.dot_general(q[:, sl], k[:, sl], (((1,), (1,)), ((), ())),
                                preferred_element_type=jnp.float32)   # (tq, Lk)
        # TODO(synk): additive attention_mask / position_bias would go here.
        m = jnp.max(s, axis=-1, keepdims=True)
        p = jnp.exp(s - m)
        denom = jnp.sum(p, axis=-1, keepdims=True)
        ctx_h = jnp.dot(p.astype(mm_dtype), v[:, sl],
                        preferred_element_type=jnp.float32)           # (tq, dk)
        # Deferred softmax normalization: scale ctx instead of dividing p.
        ctx_h = ctx_h * pl.reciprocal(denom, approx=not exact)
        ctx_parts.append(ctx_h.astype(mm_dtype))
    ctx = ctx_parts[0] if group == 1 else jnp.concatenate(ctx_parts, axis=-1)

    # --- group slice of the output projection (G*dk-deep contraction) ------
    acc_ref[...] += jnp.dot(ctx, wo_ref[0], preferred_element_type=jnp.float32)

    @pl.when(g == pl.num_programs(2) - 1)
    def _():
        out_ref[0] = acc_ref[...].astype(out_ref.dtype)


# --------------------------------------------------------------------------
# One-time (outside the per-call jit path) weight preparation:
# torch nn.Linear weights (d_out, d_in) -> per-head-group kernel slabs.
# --------------------------------------------------------------------------
def prepare_params(w_ln, w_q, w_k, w_v, w_o, n_heads, d_kv,
                   matmul_dtype=jnp.bfloat16, head_group=None):
    inner, d_model = w_q.shape
    assert inner == n_heads * d_kv
    if head_group is None:
        head_group = _pick_head_group(n_heads, d_kv)
    assert n_heads % head_group == 0
    ng = n_heads // head_group
    gdk = head_group * d_kv
    # x @ W^T, head h uses rows [h*dk:(h+1)*dk) of W; group g -> rows
    # [g*G*dk:(g+1)*G*dk), transposed so d_model is the contraction dim.
    wq_g = jnp.transpose(w_q.reshape(ng, gdk, d_model), (0, 2, 1))
    wk_g = jnp.transpose(w_k.reshape(ng, gdk, d_model), (0, 2, 1))
    wv_g = jnp.transpose(w_v.reshape(ng, gdk, d_model), (0, 2, 1))
    wkv_g = jnp.concatenate([wk_g, wv_g], axis=-1)          # (ng, dm, 2*G*dk)
    # W_o^T rows [g*G*dk:(g+1)*G*dk) for group g.
    wo_g = jnp.transpose(w_o, (1, 0)).reshape(ng, gdk, d_model)
    return (w_ln.reshape(1, d_model),
            wq_g.astype(matmul_dtype), wkv_g.astype(matmul_dtype),
            wo_g.astype(matmul_dtype))


@functools.partial(jax.jit, static_argnames=("d_kv", "q_tile", "kv_tile"))
def t5_layer_cross_attention(hidden_states, key_value_states,
                             w_ln2, wq_g, wkv_g, wo_g,
                             *, d_kv, q_tile=256, kv_tile=512):
    """hidden_states: (B, Lq, d_model); key_value_states: (B, Lk, d_model)."""
    B, Lq, dm = hidden_states.shape
    _, Lk, _ = key_value_states.shape
    ng, _, gdk = wq_g.shape
    group = gdk // d_kv
    n_heads = ng * group
    inner = n_heads * d_kv
    mm_dtype = wq_g.dtype

    tq = min(q_tile, _round_up(Lq, _row_multiple(hidden_states.dtype)))
    kvt = min(kv_tile, _round_up(Lk, _row_multiple(key_value_states.dtype)))
    n_qtiles = pl.cdiv(Lq, tq)

    def _isz(d):
        return jnp.dtype(d).itemsize

    # ---- Kernel 1: fused K|V projection, head-group-major lane-dense output
    kv_cost = pl.CostEstimate(
        flops=int(4 * B * Lk * dm * inner),
        transcendentals=0,
        bytes_accessed=int(B * Lk * dm * _isz(key_value_states.dtype)
                           + 2 * B * Lk * inner * _isz(mm_dtype)
                           + wkv_g.size * _isz(mm_dtype)),
    )
    k_states, v_states = pl.pallas_call(
        functools.partial(_kv_proj_kernel, group_width=gdk),
        out_shape=(jax.ShapeDtypeStruct((B, ng, Lk, gdk), mm_dtype),
                   jax.ShapeDtypeStruct((B, ng, Lk, gdk), mm_dtype)),
        grid_spec=pltpu.PrefetchScalarGridSpec(
            num_scalar_prefetch=0,
            grid=(B, pl.cdiv(Lk, kvt), ng),
            in_specs=[
                pl.BlockSpec((1, kvt, dm), lambda b, t, g: (b, t, 0)),     # kv states
                pl.BlockSpec((1, dm, 2 * gdk), lambda b, t, g: (g, 0, 0)), # Wk|Wv slab
            ],
            out_specs=(
                pl.BlockSpec((1, 1, kvt, gdk), lambda b, t, g: (b, g, t, 0)),
                pl.BlockSpec((1, 1, kvt, gdk), lambda b, t, g: (b, g, t, 0)),
            ),
        ),
        compiler_params=pltpu.CompilerParams(
            dimension_semantics=("parallel", "parallel", "parallel"),
            vmem_limit_bytes=VMEM_LIMIT_BYTES,
        ),
        cost_estimate=kv_cost,
    )(key_value_states, wkv_g)

    # ---- Kernel 2: fused norm + attention + out-proj + residual ------------
    attn_cost = pl.CostEstimate(
        flops=int(4 * B * Lq * inner * (dm + Lk)),
        transcendentals=int(B * n_heads * Lq * Lk + B * Lq),
        bytes_accessed=int(2 * B * Lq * dm * _isz(hidden_states.dtype)
                           + 2 * B * Lk * inner * _isz(mm_dtype) * n_qtiles
                           + (wq_g.size + wo_g.size) * _isz(mm_dtype)),
    )
    out = pl.pallas_call(
        functools.partial(_cross_attn_kernel, group=group, d_kv=d_kv),
        out_shape=jax.ShapeDtypeStruct((B, Lq, dm), hidden_states.dtype),
        grid_spec=pltpu.PrefetchScalarGridSpec(
            num_scalar_prefetch=0,
            grid=(B, n_qtiles, ng),
            in_specs=[
                pl.BlockSpec((1, tq, dm), lambda b, q, g: (b, q, 0)),      # hidden
                pl.BlockSpec((1, dm), lambda b, q, g: (0, 0)),             # layer-norm w
                pl.BlockSpec((1, dm, gdk), lambda b, q, g: (g, 0, 0)),     # Wq group
                pl.BlockSpec((1, 1, Lk, gdk), lambda b, q, g: (b, g, 0, 0)),  # K group
                pl.BlockSpec((1, 1, Lk, gdk), lambda b, q, g: (b, g, 0, 0)),  # V group
                pl.BlockSpec((1, gdk, dm), lambda b, q, g: (g, 0, 0)),     # Wo group
            ],
            out_specs=pl.BlockSpec((1, tq, dm), lambda b, q, g: (b, q, 0)),
            scratch_shapes=[pltpu.VMEM((tq, dm), mm_dtype),     # hoisted normed
                            pltpu.VMEM((tq, dm), jnp.float32)], # residual + acc
        ),
        compiler_params=pltpu.CompilerParams(
            dimension_semantics=("parallel", "parallel", "arbitrary"),
            vmem_limit_bytes=VMEM_LIMIT_BYTES,
        ),
        cost_estimate=attn_cost,
    )(hidden_states, w_ln2, wq_g, k_states, v_states, wo_g)
    return out


# --------------------------------------------------------------------------
# Pure-JAX reference (mirrors the PyTorch forward, eval mode, no mask/bias).
# --------------------------------------------------------------------------
def _reference(hidden, kv, w_ln, w_q, w_k, w_v, w_o, n_heads, d_kv):
    B, Lq, dm = hidden.shape
    x32 = hidden.astype(jnp.float32)
    var = jnp.mean(x32 * x32, axis=-1, keepdims=True)
    normed = (w_ln * (x32 * jax.lax.rsqrt(var + EPS))).astype(hidden.dtype)

    def shape(s):  # (B, L, inner) -> (B, H, L, dk)
        return s.reshape(B, -1, n_heads, d_kv).transpose(0, 2, 1, 3)

    q = shape(normed @ w_q.T)
    k = shape(kv @ w_k.T)
    v = shape(kv @ w_v.T)
    scores = jnp.einsum("bhqd,bhkd->bhqk", q, k)          # no 1/sqrt(dk) in T5
    attn = jax.nn.softmax(scores.astype(jnp.float32), axis=-1).astype(scores.dtype)
    ctx = jnp.einsum("bhqk,bhkd->bhqd", attn, v)
    ctx = ctx.transpose(0, 2, 1, 3).reshape(B, Lq, n_heads * d_kv)
    return hidden + ctx @ w_o.T


if __name__ == "__main__":
    B, Lq, Lk = 2, 8, 16
    d_model, n_heads, d_kv = 32, 4, 8
    inner = n_heads * d_kv

    key = jax.random.PRNGKey(0)
    k_h, k_kv, k_q, k_k, k_v, k_o = jax.random.split(key, 6)
    hidden = jax.random.normal(k_h, (B, Lq, d_model), dtype=jnp.float32)
    kv_states = jax.random.normal(k_kv, (B, Lk, d_model), dtype=jnp.float32)

    bound = 1.0 / (d_model ** 0.5)
    w_ln = jnp.ones((d_model,), jnp.float32)              # T5LayerNorm init -> ones
    w_q = jax.random.uniform(k_q, (inner, d_model), minval=-bound, maxval=bound, dtype=jnp.float32)
    w_k = jax.random.uniform(k_k, (inner, d_model), minval=-bound, maxval=bound, dtype=jnp.float32)
    w_v = jax.random.uniform(k_v, (inner, d_model), minval=-bound, maxval=bound, dtype=jnp.float32)
    w_o = jax.random.uniform(k_o, (d_model, inner), minval=-bound, maxval=bound, dtype=jnp.float32)

    ref = _reference(hidden, kv_states, w_ln, w_q, w_k, w_v, w_o, n_heads, d_kv)

    # Exact-precision path (f32 matmul operands, exact reciprocal) -> tight check.
    params_f32 = prepare_params(w_ln, w_q, w_k, w_v, w_o, n_heads, d_kv,
                                matmul_dtype=jnp.float32)
    out_f32 = jax.block_until_ready(
        t5_layer_cross_attention(hidden, kv_states, *params_f32, d_kv=d_kv))
    assert out_f32.shape == (B, Lq, d_model)
    assert jnp.allclose(out_f32, ref, atol=1e-4, rtol=1e-4), "f32 kernel mismatch"

    # Production fast path (bf16 matmul operands, f32 accumulation) -> loose check.
    # NOTE: K/V are stored in bf16 on this path (extra quantization vs f32 ref).
    params_bf16 = prepare_params(w_ln, w_q, w_k, w_v, w_o, n_heads, d_kv,
                                 matmul_dtype=jnp.bfloat16)
    out_bf16 = jax.block_until_ready(
        t5_layer_cross_attention(hidden, kv_states, *params_bf16, d_kv=d_kv))
    assert jnp.allclose(out_bf16, ref, atol=1e-1, rtol=1e-1), "bf16 kernel mismatch"

    print("KERNEL_OK")
</pallas_src>

<mosaic_0001>
module attributes {stable_mosaic.version = 11 : i64} {
  func.func @_kv_proj_kernel(%arg0: i32, %arg1: i32, %arg2: i32, %arg3: memref<1x16x32xf32, #tpu.memory_space<vmem>>, %arg4: memref<1x32x64xf32, #tpu.memory_space<vmem>>, %arg5: memref<1x1x16x32xf32, #tpu.memory_space<vmem>>, %arg6: memref<1x1x16x32xf32, #tpu.memory_space<vmem>>) attributes {dimension_semantics = [#tpu.dimension_semantics<parallel>, #tpu.dimension_semantics<parallel>, #tpu.dimension_semantics<parallel>], iteration_bounds = array<i64: 2, 1, 1>, scalar_prefetch = 0 : i64, scratch_operands = 0 : i64, tpu.core_type = #tpu.core_type<tc>, window_params = [{transform_indices = @transform_0, window_bounds = array<i64: 1, 16, 32>}, {transform_indices = @transform_1, window_bounds = array<i64: 1, 32, 64>}, {transform_indices = @transform_2, window_bounds = array<i64: 1, 1, 16, 32>}, {transform_indices = @transform_3, window_bounds = array<i64: 1, 1, 16, 32>}]} {
    %c0 = arith.constant 0 : index
    %c0_0 = arith.constant 0 : index
    %c0_1 = arith.constant 0 : index
    %0 = vector.load %arg3[%c0, %c0_0, %c0_1] : memref<1x16x32xf32, #tpu.memory_space<vmem>>, vector<1x16x32xf32>
    %1 = vector.shape_cast %0 : vector<1x16x32xf32> to vector<16x32xf32>
    %c0_2 = arith.constant 0 : index
    %c0_3 = arith.constant 0 : index
    %c0_4 = arith.constant 0 : index
    %2 = vector.load %arg4[%c0_2, %c0_3, %c0_4] : memref<1x32x64xf32, #tpu.memory_space<vmem>>, vector<1x32x64xf32>
    %3 = vector.shape_cast %2 : vector<1x32x64xf32> to vector<32x64xf32>
    %cst = arith.constant dense<0.000000e+00> : vector<16x64xf32>
    %4 = tpu.matmul %1, %3, %cst {dimension_numbers = #tpu.dot_dimension_numbers<[1], [0], [0], [1], [0, 0, 1, 1], [], []>} : vector<16x32xf32>, vector<32x64xf32>, vector<16x64xf32> -> vector<16x64xf32>
    %5 = vector.extract_strided_slice %4 {offsets = [0, 0], sizes = [16, 32], strides = [1, 1]} : vector<16x64xf32> to vector<16x32xf32>
    %c0_5 = arith.constant 0 : index
    %c0_6 = arith.constant 0 : index
    %c0_7 = arith.constant 0 : index
    %c0_8 = arith.constant 0 : index
    %6 = vector.load %arg5[%c0_5, %c0_6, %c0_7, %c0_8] : memref<1x1x16x32xf32, #tpu.memory_space<vmem>>, vector<1x1x16x32xf32>
    %7 = vector.shape_cast %6 : vector<1x1x16x32xf32> to vector<16x32xf32>
    %8 = vector.shape_cast %5 : vector<16x32xf32> to vector<1x1x16x32xf32>
    tpu.vector_store %arg5[%c0_5, %c0_6, %c0_7, %c0_8], %8 {strides = array<i32>} : memref<1x1x16x32xf32, #tpu.memory_space<vmem>>, vector<1x1x16x32xf32>,
    %9 = vector.extract_strided_slice %4 {offsets = [0, 32], sizes = [16, 32], strides = [1, 1]} : vector<16x64xf32> to vector<16x32xf32>
    %c0_9 = arith.constant 0 : index
    %c0_10 = arith.constant 0 : index
    %c0_11 = arith.constant 0 : index
    %c0_12 = arith.constant 0 : index
    %10 = vector.load %arg6[%c0_9, %c0_10, %c0_11, %c0_12] : memref<1x1x16x32xf32, #tpu.memory_space<vmem>>, vector<1x1x16x32xf32>
    %11 = vector.shape_cast %10 : vector<1x1x16x32xf32> to vector<16x32xf32>
    %12 = vector.shape_cast %9 : vector<16x32xf32> to vector<1x1x16x32xf32>
    tpu.vector_store %arg6[%c0_9, %c0_10, %c0_11, %c0_12], %12 {strides = array<i32>} : memref<1x1x16x32xf32, #tpu.memory_space<vmem>>, vector<1x1x16x32xf32>,
    return
  }
  func.func @transform_0(%arg0: i32, %arg1: i32, %arg2: i32) -> (i32, i32, i32) {
    %c0_i32 = arith.constant 0 : i32
    %c0_i32_0 = arith.constant 0 : i32
    return %arg0, %arg1, %c0_i32 : i32, i32, i32
  }
  func.func @transform_1(%arg0: i32, %arg1: i32, %arg2: i32) -> (i32, i32, i32) {
    %c0_i32 = arith.constant 0 : i32
    %c0_i32_0 = arith.constant 0 : i32
    %c0_i32_1 = arith.constant 0 : i32
    return %arg2, %c0_i32, %c0_i32_0 : i32, i32, i32
  }
  func.func @transform_2(%arg0: i32, %arg1: i32, %arg2: i32) -> (i32, i32, i32, i32) {
    %c0_i32 = arith.constant 0 : i32
    %c0_i32_0 = arith.constant 0 : i32
    return %arg0, %arg2, %arg1, %c0_i32 : i32, i32, i32, i32
  }
  func.func @transform_3(%arg0: i32, %arg1: i32, %arg2: i32) -> (i32, i32, i32, i32) {
    %c0_i32 = arith.constant 0 : i32
    %c0_i32_0 = arith.constant 0 : i32
    return %arg0, %arg2, %arg1, %c0_i32 : i32, i32, i32, i32
  }
}

module attributes {stable_mosaic.version = 11 : i64} {
  func.func @_cross_attn_kernel(%arg0: i32, %arg1: i32, %arg2: i32, %arg3: memref<1x8x32xf32, #tpu.memory_space<vmem>>, %arg4: memref<1x32xf32, #tpu.memory_space<vmem>>, %arg5: memref<1x32x32xf32, #tpu.memory_space<vmem>>, %arg6: memref<1x1x16x32xf32, #tpu.memory_space<vmem>>, %arg7: memref<1x1x16x32xf32, #tpu.memory_space<vmem>>, %arg8: memref<1x32x32xf32, #tpu.memory_space<vmem>>, %arg9: memref<1x8x32xf32, #tpu.memory_space<vmem>>, %arg10: memref<8x32xf32, #tpu.memory_space<vmem>>, %arg11: memref<8x32xf32, #tpu.memory_space<vmem>>) attributes {dimension_semantics = [#tpu.dimension_semantics<parallel>, #tpu.dimension_semantics<parallel>, #tpu.dimension_semantics<arbitrary>], iteration_bounds = array<i64: 2, 1, 1>, scalar_prefetch = 0 : i64, scratch_operands = 2 : i64, tpu.core_type = #tpu.core_type<tc>, window_params = [{transform_indices = @transform_0, window_bounds = array<i64: 1, 8, 32>}, {pipeline_mode = #tpu.pipeline_mode<synchronous>, transform_indices = @transform_1, window_bounds = array<i64: 1, 32>}, {transform_indices = @transform_2, window_bounds = array<i64: 1, 32, 32>}, {transform_indices = @transform_3, window_bounds = array<i64: 1, 1, 16, 32>}, {transform_indices = @transform_4, window_bounds = array<i64: 1, 1, 16, 32>}, {transform_indices = @transform_5, window_bounds = array<i64: 1, 32, 32>}, {transform_indices = @transform_6, window_bounds = array<i64: 1, 8, 32>}]} {
    %c0_i32 = arith.constant 0 : i32
    %0 = arith.cmpi eq, %arg2, %c0_i32 : i32
    %1 = arith.extui %0 : i1 to i32
    %c0_i32_0 = arith.constant 0 : i32
    %2 = arith.cmpi ne, %1, %c0_i32_0 : i32
    scf.if %2 {
      %c0_39 = arith.constant 0 : index
      %c0_40 = arith.constant 0 : index
      %c0_41 = arith.constant 0 : index
      %81 = vector.load %arg3[%c0_39, %c0_40, %c0_41] : memref<1x8x32xf32, #tpu.memory_space<vmem>>, vector<1x8x32xf32>
      %82 = vector.shape_cast %81 : vector<1x8x32xf32> to vector<8x32xf32>
      %83 = arith.mulf %82, %82 : vector<8x32xf32>
      %cst_42 = arith.constant dense<0.000000e+00> : vector<8xf32>
      %84 = vector.multi_reduction <add>, %83, %cst_42 [1] : vector<8x32xf32> to vector<8xf32>
      %85 = vector.shape_cast %84 : vector<8xf32> to vector<8x1xf32>
      %cst_43 = arith.constant 3.200000e+01 : f32
      %86 = vector.broadcast %cst_43 : f32 to vector<8x1xf32>
      %87 = arith.divf %85, %86 : vector<8x1xf32>
      %c0_44 = arith.constant 0 : index
      %c0_45 = arith.constant 0 : index
      %88 = vector.load %arg4[%c0_44, %c0_45] : memref<1x32xf32, #tpu.memory_space<vmem>>, vector<1x32xf32>
      %cst_46 = arith.constant 9.99999997E-7 : f32
      %89 = vector.broadcast %cst_46 : f32 to vector<8x1xf32>
      %90 = arith.addf %87, %89 : vector<8x1xf32>
      %91 = math.rsqrt %90 : vector<8x1xf32>
      %92 = vector.broadcast %91 : vector<8x1xf32> to vector<8x32xf32>
      %93 = arith.mulf %82, %92 : vector<8x32xf32>
      %94 = vector.broadcast %88 : vector<1x32xf32> to vector<8x32xf32>
      %95 = arith.mulf %94, %93 : vector<8x32xf32>
      %c0_47 = arith.constant 0 : index
      %c0_48 = arith.constant 0 : index
      %96 = vector.load %arg10[%c0_47, %c0_48] : memref<8x32xf32, #tpu.memory_space<vmem>>, vector<8x32xf32>
      tpu.vector_store %arg10[%c0_47, %c0_48], %95 {strides = array<i32>} : memref<8x32xf32, #tpu.memory_space<vmem>>, vector<8x32xf32>,
      %c0_49 = arith.constant 0 : index
      %c0_50 = arith.constant 0 : index
      %97 = vector.load %arg11[%c0_49, %c0_50] : memref<8x32xf32, #tpu.memory_space<vmem>>, vector<8x32xf32>
      tpu.vector_store %arg11[%c0_49, %c0_50], %82 {strides = array<i32>} : memref<8x32xf32, #tpu.memory_space<vmem>>, vector<8x32xf32>,
    } else {
    }
    %c0 = arith.constant 0 : index
    %c0_1 = arith.constant 0 : index
    %3 = vector.load %arg10[%c0, %c0_1] : memref<8x32xf32, #tpu.memory_space<vmem>>, vector<8x32xf32>
    %c0_2 = arith.constant 0 : index
    %c0_3 = arith.constant 0 : index
    %c0_4 = arith.constant 0 : index
    %4 = vector.load %arg5[%c0_2, %c0_3, %c0_4] : memref<1x32x32xf32, #tpu.memory_space<vmem>>, vector<1x32x32xf32>
    %5 = vector.shape_cast %4 : vector<1x32x32xf32> to vector<32x32xf32>
    %cst = arith.constant dense<0.000000e+00> : vector<8x32xf32>
    %6 = tpu.matmul %3, %5, %cst {dimension_numbers = #tpu.dot_dimension_numbers<[1], [0], [0], [1], [0, 0, 1, 1], [], []>} : vector<8x32xf32>, vector<32x32xf32>, vector<8x32xf32> -> vector<8x32xf32>
    %c0_5 = arith.constant 0 : index
    %c0_6 = arith.constant 0 : index
    %c0_7 = arith.constant 0 : index
    %c0_8 = arith.constant 0 : index
    %7 = vector.load %arg6[%c0_5, %c0_6, %c0_7, %c0_8] : memref<1x1x16x32xf32, #tpu.memory_space<vmem>>, vector<1x1x16x32xf32>
    %8 = vector.shape_cast %7 : vector<1x1x16x32xf32> to vector<16x32xf32>
    %c0_9 = arith.constant 0 : index
    %c0_10 = arith.constant 0 : index
    %c0_11 = arith.constant 0 : index
    %c0_12 = arith.constant 0 : index
    %9 = vector.load %arg7[%c0_9, %c0_10, %c0_11, %c0_12] : memref<1x1x16x32xf32, #tpu.memory_space<vmem>>, vector<1x1x16x32xf32>
    %10 = vector.shape_cast %9 : vector<1x1x16x32xf32> to vector<16x32xf32>
    %11 = vector.extract_strided_slice %6 {offsets = [0, 0], sizes = [8, 8], strides = [1, 1]} : vector<8x32xf32> to vector<8x8xf32>
    %12 = vector.extract_strided_slice %8 {offsets = [0, 0], sizes = [16, 8], strides = [1, 1]} : vector<16x32xf32> to vector<16x8xf32>
    %cst_13 = arith.constant dense<0.000000e+00> : vector<8x16xf32>
    %13 = tpu.matmul %11, %12, %cst_13 {dimension_numbers = #tpu.dot_dimension_numbers<[1], [1], [0], [0], [0, 0, 1, 0], [], []>} : vector<8x8xf32>, vector<16x8xf32>, vector<8x16xf32> -> vector<8x16xf32>
    %cst_14 = arith.constant dense<0xFF800000> : vector<8xf32>
    %14 = vector.multi_reduction <maximumf>, %13, %cst_14 [1] : vector<8x16xf32> to vector<8xf32>
    %15 = vector.shape_cast %14 : vector<8xf32> to vector<8x1xf32>
    %16 = vector.broadcast %15 : vector<8x1xf32> to vector<8x16xf32>
    %17 = arith.subf %13, %16 : vector<8x16xf32>
    %18 = math.exp %17 : vector<8x16xf32>
    %cst_15 = arith.constant dense<0.000000e+00> : vector<8xf32>
    %19 = vector.multi_reduction <add>, %18, %cst_15 [1] : vector<8x16xf32> to vector<8xf32>
    %20 = vector.shape_cast %19 : vector<8xf32> to vector<8x1xf32>
    %21 = vector.extract_strided_slice %10 {offsets = [0, 0], sizes = [16, 8], strides = [1, 1]} : vector<16x32xf32> to vector<16x8xf32>
    %cst_16 = arith.constant dense<0.000000e+00> : vector<8x8xf32>
    %22 = tpu.matmul %18, %21, %cst_16 {dimension_numbers = #tpu.dot_dimension_numbers<[1], [0], [0], [1], [0, 0, 1, 1], [], []>} : vector<8x16xf32>, vector<16x8xf32>, vector<8x8xf32> -> vector<8x8xf32>
    %23 = tpu.reciprocal %20 : vector<8x1xf32> -> vector<8x1xf32>
    %24 = vector.broadcast %23 : vector<8x1xf32> to vector<8x8xf32>
    %25 = arith.mulf %22, %24 : vector<8x8xf32>
    %26 = vector.extract_strided_slice %6 {offsets = [0, 8], sizes = [8, 8], strides = [1, 1]} : vector<8x32xf32> to vector<8x8xf32>
    %27 = vector.extract_strided_slice %8 {offsets = [0, 8], sizes = [16, 8], strides = [1, 1]} : vector<16x32xf32> to vector<16x8xf32>
    %cst_17 = arith.constant dense<0.000000e+00> : vector<8x16xf32>
    %28 = tpu.matmul %26, %27, %cst_17 {dimension_numbers = #tpu.dot_dimension_numbers<[1], [1], [0], [0], [0, 0, 1, 0], [], []>} : vector<8x8xf32>, vector<16x8xf32>, vector<8x16xf32> -> vector<8x16xf32>
    %cst_18 = arith.constant dense<0xFF800000> : vector<8xf32>
    %29 = vector.multi_reduction <maximumf>, %28, %cst_18 [1] : vector<8x16xf32> to vector<8xf32>
    %30 = vector.shape_cast %29 : vector<8xf32> to vector<8x1xf32>
    %31 = vector.broadcast %30 : vector<8x1xf32> to vector<8x16xf32>
    %32 = arith.subf %28, %31 : vector<8x16xf32>
    %33 = math.exp %32 : vector<8x16xf32>
    %cst_19 = arith.constant dense<0.000000e+00> : vector<8xf32>
    %34 = vector.multi_reduction <add>, %33, %cst_19 [1] : vector<8x16xf32> to vector<8xf32>
    %35 = vector.shape_cast %34 : vector<8xf32> to vector<8x1xf32>
    %36 = vector.extract_strided_slice %10 {offsets = [0, 8], sizes = [16, 8], strides = [1, 1]} : vector<16x32xf32> to vector<16x8xf32>
    %cst_20 = arith.constant dense<0.000000e+00> : vector<8x8xf32>
    %37 = tpu.matmul %33, %36, %cst_20 {dimension_numbers = #tpu.dot_dimension_numbers<[1], [0], [0], [1], [0, 0, 1, 1], [], []>} : vector<8x16xf32>, vector<16x8xf32>, vector<8x8xf32> -> vector<8x8xf32>
    %38 = tpu.reciprocal %35 : vector<8x1xf32> -> vector<8x1xf32>
    %39 = vector.broadcast %38 : vector<8x1xf32> to vector<8x8xf32>
    %40 = arith.mulf %37, %39 : vector<8x8xf32>
    %41 = vector.extract_strided_slice %6 {offsets = [0, 16], sizes = [8, 8], strides = [1, 1]} : vector<8x32xf32> to vector<8x8xf32>
    %42 = vector.extract_strided_slice %8 {offsets = [0, 16], sizes = [16, 8], strides = [1, 1]} : vector<16x32xf32> to vector<16x8xf32>
    %cst_21 = arith.constant dense<0.000000e+00> : vector<8x16xf32>
    %43 = tpu.matmul %41, %42, %cst_21 {dimension_numbers = #tpu.dot_dimension_numbers<[1], [1], [0], [0], [0, 0, 1, 0], [], []>} : vector<8x8xf32>, vector<16x8xf32>, vector<8x16xf32> -> vector<8x16xf32>
    %cst_22 = arith.constant dense<0xFF800000> : vector<8xf32>
    %44 = vector.multi_reduction <maximumf>, %43, %cst_22 [1] : vector<8x16xf32> to vector<8xf32>
    %45 = vector.shape_cast %44 : vector<8xf32> to vector<8x1xf32>
    %46 = vector.broadcast %45 : vector<8x1xf32> to vector<8x16xf32>
    %47 = arith.subf %43, %46 : vector<8x16xf32>
    %48 = math.exp %47 : vector<8x16xf32>
    %cst_23 = arith.constant dense<0.000000e+00> : vector<8xf32>
    %49 = vector.multi_reduction <add>, %48, %cst_23 [1] : vector<8x16xf32> to vector<8xf32>
    %50 = vector.shape_cast %49 : vector<8xf32> to vector<8x1xf32>
    %51 = vector.extract_strided_slice %10 {offsets = [0, 16], sizes = [16, 8], strides = [1, 1]} : vector<16x32xf32> to vector<16x8xf32>
    %cst_24 = arith.constant dense<0.000000e+00> : vector<8x8xf32>
    %52 = tpu.matmul %48, %51, %cst_24 {dimension_numbers = #tpu.dot_dimension_numbers<[1], [0], [0], [1], [0, 0, 1, 1], [], []>} : vector<8x16xf32>, vector<16x8xf32>, vector<8x8xf32> -> vector<8x8xf32>
    %53 = tpu.reciprocal %50 : vector<8x1xf32> -> vector<8x1xf32>
    %54 = vector.broadcast %53 : vector<8x1xf32> to vector<8x8xf32>
    %55 = arith.mulf %52, %54 : vector<8x8xf32>
    %56 = vector.extract_strided_slice %6 {offsets = [0, 24], sizes = [8, 8], strides = [1, 1]} : vector<8x32xf32> to vector<8x8xf32>
    %57 = vector.extract_strided_slice %8 {offsets = [0, 24], sizes = [16, 8], strides = [1, 1]} : vector<16x32xf32> to vector<16x8xf32>
    %cst_25 = arith.constant dense<0.000000e+00> : vector<8x16xf32>
    %58 = tpu.matmul %56, %57, %cst_25 {dimension_numbers = #tpu.dot_dimension_numbers<[1], [1], [0], [0], [0, 0, 1, 0], [], []>} : vector<8x8xf32>, vector<16x8xf32>, vector<8x16xf32> -> vector<8x16xf32>
    %cst_26 = arith.constant dense<0xFF800000> : vector<8xf32>
    %59 = vector.multi_reduction <maximumf>, %58, %cst_26 [1] : vector<8x16xf32> to vector<8xf32>
    %60 = vector.shape_cast %59 : vector<8xf32> to vector<8x1xf32>
    %61 = vector.broadcast %60 : vector<8x1xf32> to vector<8x16xf32>
    %62 = arith.subf %58, %61 : vector<8x16xf32>
    %63 = math.exp %62 : vector<8x16xf32>
    %cst_27 = arith.constant dense<0.000000e+00> : vector<8xf32>
    %64 = vector.multi_reduction <add>, %63, %cst_27 [1] : vector<8x16xf32> to vector<8xf32>
    %65 = vector.shape_cast %64 : vector<8xf32> to vector<8x1xf32>
    %66 = vector.extract_strided_slice %10 {offsets = [0, 24], sizes = [16, 8], strides = [1, 1]} : vector<16x32xf32> to vector<16x8xf32>
    %cst_28 = arith.constant dense<0.000000e+00> : vector<8x8xf32>
    %67 = tpu.matmul %63, %66, %cst_28 {dimension_numbers = #tpu.dot_dimension_numbers<[1], [0], [0], [1], [0, 0, 1, 1], [], []>} : vector<8x16xf32>, vector<16x8xf32>, vector<8x8xf32> -> vector<8x8xf32>
    %68 = tpu.reciprocal %65 : vector<8x1xf32> -> vector<8x1xf32>
    %69 = vector.broadcast %68 : vector<8x1xf32> to vector<8x8xf32>
    %70 = arith.mulf %67, %69 : vector<8x8xf32>
    %71 = tpu.concatenate %25, %40, %55, %70 in 1 : vector<8x8xf32>, vector<8x8xf32>, vector<8x8xf32>, vector<8x8xf32> -> vector<8x32xf32>
    %c0_29 = arith.constant 0 : index
    %c0_30 = arith.constant 0 : index
    %72 = vector.load %arg11[%c0_29, %c0_30] : memref<8x32xf32, #tpu.memory_space<vmem>>, vector<8x32xf32>
    %c0_31 = arith.constant 0 : index
    %c0_32 = arith.constant 0 : index
    %c0_33 = arith.constant 0 : index
    %73 = vector.load %arg8[%c0_31, %c0_32, %c0_33] : memref<1x32x32xf32, #tpu.memory_space<vmem>>, vector<1x32x32xf32>
    %74 = vector.shape_cast %73 : vector<1x32x32xf32> to vector<32x32xf32>
    %cst_34 = arith.constant dense<0.000000e+00> : vector<8x32xf32>
    %75 = tpu.matmul %71, %74, %cst_34 {dimension_numbers = #tpu.dot_dimension_numbers<[1], [0], [0], [1], [0, 0, 1, 1], [], []>} : vector<8x32xf32>, vector<32x32xf32>, vector<8x32xf32> -> vector<8x32xf32>
    %76 = arith.addf %72, %75 : vector<8x32xf32>
    %c0_35 = arith.constant 0 : index
    %c0_36 = arith.constant 0 : index
    %77 = vector.load %arg11[%c0_35, %c0_36] : memref<8x32xf32, #tpu.memory_space<vmem>>, vector<8x32xf32>
    tpu.vector_store %arg11[%c0_35, %c0_36], %76 {strides = array<i32>} : memref<8x32xf32, #tpu.memory_space<vmem>>, vector<8x32xf32>,
    %c0_i32_37 = arith.constant 0 : i32
    %78 = arith.cmpi eq, %arg2, %c0_i32_37 : i32
    %79 = arith.extui %78 : i1 to i32
    %c0_i32_38 = arith.constant 0 : i32
    %80 = arith.cmpi ne, %79, %c0_i32_38 : i32
    scf.if %80 {
      %c0_39 = arith.constant 0 : index
      %c0_40 = arith.constant 0 : index
      %81 = vector.load %arg11[%c0_39, %c0_40] : memref<8x32xf32, #tpu.memory_space<vmem>>, vector<8x32xf32>
      %c0_41 = arith.constant 0 : index
      %c0_42 = arith.constant 0 : index
      %c0_43 = arith.constant 0 : index
      %82 = vector.load %arg9[%c0_41, %c0_42, %c0_43] : memref<1x8x32xf32, #tpu.memory_space<vmem>>, vector<1x8x32xf32>
      %83 = vector.shape_cast %82 : vector<1x8x32xf32> to vector<8x32xf32>
      %84 = vector.shape_cast %81 : vector<8x32xf32> to vector<1x8x32xf32>
      tpu.vector_store %arg9[%c0_41, %c0_42, %c0_43], %84 {strides = array<i32>} : memref<1x8x32xf32, #tpu.memory_space<vmem>>, vector<1x8x32xf32>,
    } else {
    }
    return
  }
  func.func @transform_0(%arg0: i32, %arg1: i32, %arg2: i32) -> (i32, i32, i32) {
    %c0_i32 = arith.constant 0 : i32
    %c0_i32_0 = arith.constant 0 : i32
    return %arg0, %arg1, %c0_i32 : i32, i32, i32
  }
  func.func @transform_1(%arg0: i32, %arg1: i32, %arg2: i32) -> (i32, i32) {
    %c0_i32 = arith.constant 0 : i32
    %c0_i32_0 = arith.constant 0 : i32
    %c0_i32_1 = arith.constant 0 : i32
    return %c0_i32, %c0_i32_0 : i32, i32
  }
  func.func @transform_2(%arg0: i32, %arg1: i32, %arg2: i32) -> (i32, i32, i32) {
    %c0_i32 = arith.constant 0 : i32
    %c0_i32_0 = arith.constant 0 : i32
    %c0_i32_1 = arith.constant 0 : i32
    return %arg2, %c0_i32, %c0_i32_0 : i32, i32, i32
  }
  func.func @transform_3(%arg0: i32, %arg1: i32, %arg2: i32) -> (i32, i32, i32, i32) {
    %c0_i32 = arith.constant 0 : i32
    %c0_i32_0 = arith.constant 0 : i32
    %c0_i32_1 = arith.constant 0 : i32
    return %arg0, %arg2, %c0_i32, %c0_i32_0 : i32, i32, i32, i32
  }
  func.func @transform_4(%arg0: i32, %arg1: i32, %arg2: i32) -> (i32, i32, i32, i32) {
    %c0_i32 = arith.constant 0 : i32
    %c0_i32_0 = arith.constant 0 : i32
    %c0_i32_1 = arith.constant 0 : i32
    return %arg0, %arg2, %c0_i32, %c0_i32_0 : i32, i32, i32, i32
  }
  func.func @transform_5(%arg0: i32, %arg1: i32, %arg2: i32) -> (i32, i32, i32) {
    %c0_i32 = arith.constant 0 : i32
    %c0_i32_0 = arith.constant 0 : i32
    %c0_i32_1 = arith.constant 0 : i32
    return %arg2, %c0_i32, %c0_i32_0 : i32, i32, i32
  }
  func.func @transform_6(%arg0: i32, %arg1: i32, %arg2: i32) -> (i32, i32, i32) {
    %c0_i32 = arith.constant 0 : i32
    %c0_i32_0 = arith.constant 0 : i32
    return %arg0, %arg1, %c0_i32 : i32, i32, i32
  }
}

</mosaic_0001>

<llo_original>
// kernel: t5_layer_cross_attention.2
$region0: #{t5_layer_cross_attention.2}
  #allocation0 [shape = 'u32[]', space=smem, size = 0x4, offset = 0x4, fixed_abs, tag = 'smem constant byte address 0x4 - core index']
  #allocation1 [shape = 'u32[144,128]{1,0:T(1,128)}', space=vmem, size = 0x12000, scoped, tag = 'internal scratch']
  %s0 = inlined_call_operand.hbm [shape: f32[2,16,32], index: 0, kind: input, shape index: {}]
  %s1 = inlined_call_operand.hbm [shape: f32[1,32,64], index: 1, kind: input, shape index: {}]
  %s2 = inlined_call_operand.vmem [shape: f32[2,1,16,32], index: 2, kind: output, shape index: {0}]
  %s3 = inlined_call_operand.vmem [shape: f32[2,1,16,32], index: 3, kind: output, shape index: {1}]
  %4 = xla_tuple %s2, %s3
  %s5 = sld [smem:[#allocation0]]
  $region57: #{t5_layer_cross_attention.2} parent=0
    _
  %s7 = ssub.s32 1, %s5
  %s8 = scalar_select 0, %s7, %s5
  $region1: #{t5_layer_cross_attention.2} parent=0
    #allocation2 [shape = 'u8[16384]{0}', space=vmem, size = 0x4000, scoped, tag = 'input window, operand 0']
    #allocation3 [shape = 's32[2]{0}', space=sflag, size = 0x8, scoped, tag = 'scoped memory for t5_layer_cross_attention.2']
    #allocation4 [shape = 'u8[16384]{0}', space=vmem, size = 0x4000, scoped, tag = 'input window, operand 1, single buffered']
    #allocation5 [shape = 's32[1]{0}', space=sflag, size = 0x4, scoped, tag = 'scoped memory for t5_layer_cross_attention.2']
    %9 = vsyncpa [#allocation3], 0
    %s10 = scalar_lea.sflag [#allocation3], 1
    %11 = vsyncpa %s10, 0
    %12 = vsyncpa [#allocation5], 0
    loop: start=0, step=1, limit=4
    $region2: #{t5_layer_cross_attention.2} parent=1 // loop_pre_header
      _
    $region3: #{t5_layer_cross_attention.2} parent=1 // loop_header
      %s14 = sphi 0, %s18
      %p15 = scmp.ge.s32.totalorder %s14, 4
      %s21 = sphi 0, %s40
      %s22 = sphi 0, %s36
      %s23 = sphi 0, %s32
      %s24 = sphi 0, %s21
      %s25 = sphi 0, %s22
      %s26 = sphi 0, %s23
      %s27 = sphi 0, %s24
      %s28 = sphi 0, %s25
      %s29 = sphi 0, %s26
      %s45 = sphi 0, %s47
      %s48 = sphi 0, %s45
      %s49 = sphi 0, %s48
      %s65 = sphi 0, %s49
      %s71 = sphi 0, %s73
      %s74 = sphi 0, %s71
      %s75 = sphi 0, %s74
      %s91 = sphi 0, %s75
      %s101 = sphi 0, %s103
      %s104 = sphi 0, %s101
      %s105 = sphi 0, %s104
      %s121 = sphi 0, %s105
      %s131 = sphi 0, %s133
      %s134 = sphi 0, %s131
      %s135 = sphi 0, %s134
      %s151 = sphi 0, %s135
    $region4: #{t5_layer_cross_attention.2} parent=1 // loop_header_branch
      %17 = sbr.rel (%p15) target = $region8
    $region5: #{t5_layer_cross_attention.2} parent=1 // loop_body
      %s19 = ssub.s32 %s14, 1
      %s20 = ssub.s32 %s14, 2
      %s30 = sadd.s32 1, %s23
      %p31 = scmp.ge.s32.totalorder %s30, 1
      %s32 = scalar_select %p31, 0, %s30
      %s33 = sadd.s32 1, %s22
      %s34 = scalar_select %p31, %s33, %s22
      %p35 = scmp.ge.s32.totalorder %s34, 1
      %s36 = scalar_select %p35, 0, %s34
      %s37 = sadd.s32 1, %s21
      %s38 = scalar_select %p35, %s37, %s21
      %p39 = scmp.ge.s32.totalorder %s38, 2
      %s40 = scalar_select %p39, 0, %s38
      %s41 = ssub.s32 %s21, %s40
      %s42 = ssub.s32 %s22, %s36
      %s43 = sor.u32 %s41, %s42
      %p44 = scmp.eq.s32.totalorder %s43, 0
      %s46 = sadd.s32 %s45, 1
      %s47 = scalar_select %p44, %s45, %s46
      %p50 = pneg %p44
      %p51 = scmp.eq.s32.totalorder %s14, 1
      %p52 = por %p50, %p51
      %p53 = scmp.ne.s32.totalorder %s45, %s48
      %p54 = scmp.eq.s32.totalorder %s14, 0
      %p55 = por %p53, %p54
      %p56 = scmp.ne.s32.totalorder %s45, %s48
      %p57 = scmp.eq.s32.totalorder %s19, 1
      %p58 = por %p56, %p57
      %p59 = scmp.ne.s32.totalorder %s48, %s49
      %p60 = scmp.eq.s32.totalorder %s19, 0
      %p61 = por %p59, %p60
      %p62 = scmp.ne.s32.totalorder %s48, %s49
      %p63 = scmp.eq.s32.totalorder %s20, 1
      %p64 = por %p62, %p63
      %p66 = scmp.ne.s32.totalorder %s49, %s65
      %p67 = scmp.eq.s32.totalorder %s20, 0
      %p68 = por %p66, %p67
      %s69 = ssub.s32 %s23, %s32
      %p70 = scmp.eq.s32.totalorder %s69, 0
      %s72 = sadd.s32 %s71, 1
      %s73 = scalar_select %p70, %s71, %s72
      %p76 = pneg %p70
      %p77 = scmp.eq.s32.totalorder %s14, 1
      %p78 = por %p76, %p77
      %p79 = scmp.ne.s32.totalorder %s71, %s74
      %p80 = scmp.eq.s32.totalorder %s14, 0
      %p81 = por %p79, %p80
      %p82 = scmp.ne.s32.totalorder %s71, %s74
      %p83 = scmp.eq.s32.totalorder %s19, 1
      %p84 = por %p82, %p83
      %p85 = scmp.ne.s32.totalorder %s74, %s75
      %p86 = scmp.eq.s32.totalorder %s19, 0
      %p87 = por %p85, %p86
      %p88 = scmp.ne.s32.totalorder %s74, %s75
      %p89 = scmp.eq.s32.totalorder %s20, 1
      %p90 = por %p88, %p89
      %p92 = scmp.ne.s32.totalorder %s75, %s91
      %p93 = scmp.eq.s32.totalorder %s20, 0
      %p94 = por %p92, %p93
      %s95 = ssub.s32 %s21, %s40
      %s96 = ssub.s32 %s23, %s32
      %s97 = sor.u32 %s95, %s96
      %s98 = ssub.s32 %s22, %s36
      %s99 = sor.u32 %s97, %s98
      %p100 = scmp.eq.s32.totalorder %s99, 0
      %s102 = sadd.s32 %s101, 1
      %s103 = scalar_select %p100, %s101, %s102
      %p106 = pneg %p100
      %p107 = scmp.eq.s32.totalorder %s14, 1
      %p108 = por %p106, %p107
      %p109 = scmp.ne.s32.totalorder %s101, %s104
      %p110 = scmp.eq.s32.totalorder %s14, 0
      %p111 = por %p109, %p110
      %p112 = scmp.ne.s32.totalorder %s101, %s104
      %p113 = scmp.eq.s32.totalorder %s19, 1
      %p114 = por %p112, %p113
      %p115 = scmp.ne.s32.totalorder %s104, %s105
      %p116 = scmp.eq.s32.totalorder %s19, 0
      %p117 = por %p115, %p116
      %p118 = scmp.ne.s32.totalorder %s104, %s105
      %p119 = scmp.eq.s32.totalorder %s20, 1
      %p120 = por %p118, %p119
      %p122 = scmp.ne.s32.totalorder %s105, %s121
      %p123 = scmp.eq.s32.totalorder %s20, 0
      %p124 = por %p122, %p123
      %s125 = ssub.s32 %s21, %s40
      %s126 = ssub.s32 %s23, %s32
      %s127 = sor.u32 %s125, %s126
      %s128 = ssub.s32 %s22, %s36
      %s129 = sor.u32 %s127, %s128
      %p130 = scmp.eq.s32.totalorder %s129, 0
      %s132 = sadd.s32 %s131, 1
      %s133 = scalar_select %p130, %s131, %s132
      %p136 = pneg %p130
      %p137 = scmp.eq.s32.totalorder %s14, 1
      %p138 = por %p136, %p137
      %p139 = scmp.ne.s32.totalorder %s131, %s134
      %p140 = scmp.eq.s32.totalorder %s14, 0
      %p141 = por %p139, %p140
      %p142 = scmp.ne.s32.totalorder %s131, %s134
      %p143 = scmp.eq.s32.totalorder %s19, 1
      %p144 = por %p142, %p143
      %p145 = scmp.ne.s32.totalorder %s134, %s135
      %p146 = scmp.eq.s32.totalorder %s19, 0
      %p147 = por %p145, %p146
      %p148 = scmp.ne.s32.totalorder %s134, %s135
      %p149 = scmp.eq.s32.totalorder %s20, 1
      %p150 = por %p148, %p149
      %p152 = scmp.ne.s32.totalorder %s135, %s151
      %p153 = scmp.eq.s32.totalorder %s20, 0
      %p154 = por %p152, %p153
      %p155 = scmp.le.s32.totalorder 1, %s14
      %p156 = scmp.lt.s32.totalorder %s14, 3
      %p157 = pnand %p155, %p156
      %p158 = pneg %p157
      // Predicated region
      $region9: #{t5_layer_cross_attention.2} parent=5 // pred_check
        _
      $region10: #{t5_layer_cross_attention.2} parent=5 // pred_check_branch
        %160 = sbr.rel (%p157) target = $region12
      $region11: #{t5_layer_cross_attention.2} parent=5 // pred_region
        %s161 = ssub.s32 %s14, 1
        // Predicated region
        $region13: #{t5_layer_cross_attention.2} parent=11 // pred_check
          %p162 = pneg %p87
        $region14: #{t5_layer_cross_attention.2} parent=11 // pred_check_branch
          %164 = sbr.rel (%p162) target = $region16
        $region15: #{t5_layer_cross_attention.2} parent=11 // pred_region
          %s166 = ssub.s32 512, 512
          %167 = vsyncadd [#allocation5], %s166
          %s168 = smul.addr %s26, 4
          %s169 = smul.addr %s168, 128
          %s170 = scalar_lea.hbm %s1, %s169
          %s171 = sshll.u32 [#allocation4], 4
          %s172 = int_to_ptr.vmem [resolvable:$true] %s171
          %177 = dma.hbm_to_vmem [thread:$0]  %s170, 512, %s172, [#allocation5], 128, 128, 8
        $region16: #{t5_layer_cross_attention.2} parent=11 // pred_fallthru
          _
      $region12: #{t5_layer_cross_attention.2} parent=5 // pred_fallthru
        _
      %p178 = scmp.lt.s32.totalorder %s14, 2
      // Predicated region
      $region17: #{t5_layer_cross_attention.2} parent=5 // pred_check
        %p179 = pneg %p178
      $region18: #{t5_layer_cross_attention.2} parent=5 // pred_check_branch
        %181 = sbr.rel (%p179) target = $region20
      $region19: #{t5_layer_cross_attention.2} parent=5 // pred_region
        // Predicated region
        $region21: #{t5_layer_cross_attention.2} parent=19 // pred_check
          %p182 = pneg %p55
        $region22: #{t5_layer_cross_attention.2} parent=19 // pred_check_branch
          %184 = sbr.rel (%p182) target = $region24
        $region23: #{t5_layer_cross_attention.2} parent=19 // pred_region
          %s185 = sand.u32 %s45, 1
          %s186 = scalar_lea.sflag [#allocation3], %s185
          %s187 = sand.u32 %s45, 1
          %s188 = smul.addr %s187, 16
          %s189 = scalar_lea.vmem [#allocation2], %s188
          %s190 = smul.u32 2, %s22
          %s192 = ssub.s32 256, 256
          %193 = vsyncadd %s186, %s192
          %s194 = smul.addr %s21, 2
          %s195 = sadd.s32 %s190, %s194
          %s196 = smul.addr %s195, 128
          %s197 = scalar_lea.hbm %s0, %s196
          %s198 = sshll.u32 %s189, 4
          %s199 = int_to_ptr.vmem [resolvable:$true] %s198
          %204 = dma.hbm_to_vmem [thread:$0]  %s197, 256, %s199, %s186, 128, 128, 8
        $region24: #{t5_layer_cross_attention.2} parent=19 // pred_fallthru
          _
      $region20: #{t5_layer_cross_attention.2} parent=5 // pred_fallthru
        _
      %p205 = scmp.le.s32.totalorder 1, %s14
      %p206 = scmp.lt.s32.totalorder %s14, 3
      %p207 = pnand %p205, %p206
      %p208 = pneg %p207
      // Predicated region
      $region25: #{t5_layer_cross_attention.2} parent=5 // pred_check
        _
      $region26: #{t5_layer_cross_attention.2} parent=5 // pred_check_branch
        %210 = sbr.rel (%p207) target = $region28
      $region27: #{t5_layer_cross_attention.2} parent=5 // pred_region
        %s211 = ssub.s32 %s14, 1
        %s212 = sand.u32 %s48, 1
        %s213 = scalar_lea.sflag [#allocation3], %s212
        %s214 = sand.u32 %s48, 1
        %s215 = smul.addr %s214, 16
        %s216 = scalar_lea.vmem [#allocation2], %s215
        // Predicated region
        $region29: #{t5_layer_cross_attention.2} parent=27 // pred_check
          %p217 = pneg %p61
        $region30: #{t5_layer_cross_attention.2} parent=27 // pred_check_branch
          %219 = sbr.rel (%p217) target = $region32
        $region31: #{t5_layer_cross_attention.2} parent=27 // pred_region
          %220 = dma.done %s213, 256
        $region32: #{t5_layer_cross_attention.2} parent=27 // pred_fallthru
          _
        // Predicated region
        $region33: #{t5_layer_cross_attention.2} parent=27 // pred_check
          %p221 = pneg %p87
        $region34: #{t5_layer_cross_attention.2} parent=27 // pred_check_branch
          %223 = sbr.rel (%p221) target = $region36
        $region35: #{t5_layer_cross_attention.2} parent=27 // pred_region
          %224 = dma.done [#allocation5], 512
        $region36: #{t5_layer_cross_attention.2} parent=27 // pred_fallthru
          _
        %s225 = sand.u32 %s48, 1
        %s226 = scalar_lea.sflag [#allocation3], %s225
        %s227 = sand.u32 %s48, 1
        %s228 = smul.addr %s227, 16
        %s229 = scalar_lea.vmem [#allocation2], %s228
        %p230 = pneg %p61
        %p231 = pneg %p58
        %p232 = pneg %p87
        %p233 = pneg %p84
        %p234 = pneg %p117
        %p235 = pneg %p114
        %s236 = smul.u32 2, %s25
        %p237 = scmp.lt.s32.totalorder %s24, 1
        %s238 = scalar_select %p237, %s24, 1
        %p239 = scmp.lt.s32.totalorder %s26, 0
        %s240 = scalar_select %p239, %s26, 0
        %p241 = scmp.lt.s32.totalorder %s236, 1
        %s242 = scalar_select %p241, %s236, 1
        %s243 = smul.addr %s240, 2
        %s244 = sadd.s32 %s242, %s243
        %s245 = smul.addr %s238, 2
        %s246 = sadd.s32 %s244, %s245
        %s247 = smul.addr %s246, 8
        %s248 = scalar_lea.vmem %s2, %s247
        %p249 = pneg %p147
        %p250 = pneg %p144
        %s251 = smul.u32 2, %s25
        %p252 = scmp.lt.s32.totalorder %s24, 1
        %s253 = scalar_select %p252, %s24, 1
        %p254 = scmp.lt.s32.totalorder %s26, 0
        %s255 = scalar_select %p254, %s26, 0
        %p256 = scmp.lt.s32.totalorder %s251, 1
        %s257 = scalar_select %p256, %s251, 1
        %s258 = smul.addr %s255, 2
        %s259 = sadd.s32 %s257, %s258
        %s260 = smul.addr %s253, 2
        %s261 = sadd.s32 %s259, %s260
        %s262 = smul.addr %s261, 8
        %s263 = scalar_lea.vmem %s3, %s262
        %s264 = smul.u32 2, %s25
        %s265 = smul.u32 2, %s25
        %p266 = scmp.lt.s32.totalorder %s24, 1
        %s267 = scalar_select %p266, %s24, 1
        %p268 = scmp.lt.s32.totalorder %s26, 0
        %s269 = scalar_select %p268, %s26, 0
        %p270 = scmp.lt.s32.totalorder %s265, 1
        %s271 = scalar_select %p270, %s265, 1
        %s272 = smul.addr %s269, 2
        %s273 = sadd.s32 %s271, %s272
        %s274 = smul.addr %s267, 2
        %s275 = sadd.s32 %s273, %s274
        %s276 = smul.addr %s275, 8
        %s277 = scalar_lea.vmem %s2, %s276
        %s278 = smul.u32 2, %s25
        %s279 = smul.u32 2, %s25
        %p280 = scmp.lt.s32.totalorder %s24, 1
        %s281 = scalar_select %p280, %s24, 1
        %p282 = scmp.lt.s32.totalorder %s26, 0
        %s283 = scalar_select %p282, %s26, 0
        %p284 = scmp.lt.s32.totalorder %s279, 1
        %s285 = scalar_select %p284, %s279, 1
        %s286 = smul.addr %s283, 2
        %s287 = sadd.s32 %s285, %s286
        %s288 = smul.addr %s281, 2
        %s289 = sadd.s32 %s287, %s288
        %s290 = smul.addr %s289, 8
        %s291 = scalar_lea.vmem %s3, %s290
        %s292 = smul.u32 2, %s25
        %v293 = vld [vmem:[%s216] sm:$0xff]
        %v294 = vld [vmem:[%s216 + $0x8] sm:$0xff]
        %v295 = vld [vmem:[#allocation4] sm:$0xff]
        %v296 = vld [vmem:[#allocation4 + $0x8] sm:$0xff]
        %v297 = vld [vmem:[#allocation4 + $0x10] sm:$0xff]
        %v298 = vld [vmem:[#allocation4 + $0x18] sm:$0xff]
        %vm299 = vcmask 261120
        %v301 = vsel %vm299, %v293, 0
        %v304 = vsel %vm299, %v294, 0
        %306 = vmatprep.subr.mxu0 0.0
        %307 = vmatpush1.msra.mxu0 %v295
        %308 = vmatprep.subr.mxu0 0.0
        %309 = vmatpush1.msra.mxu0 %v296
        %310 = vmatprep.subr.mxu0 0.0
        %311 = vmatpush1.msra.mxu0 %v297
        %312 = vmatprep.subr.mxu0 0.0
        %313 = vmatpush1.msra.mxu0 %v298
        %314 = vmatprep.subr.mxu0 0.0
        %315 = vmatpush1.msra.mxu0 0.0
        %316 = vmatprep.subr.mxu0 0.0
        %317 = vmatpush1.msra.mxu0 0.0
        %318 = vmatprep.subr.mxu0 0.0
        %319 = vmatpush1.msra.mxu0 0.0
        %320 = vmatprep.subr.mxu0 0.0
        %321 = vmatpush1.msra.mxu0 0.0
        %322 = vmatprep.subr.mxu0 0.0
        %323 = vmatpush1.msra.mxu0 0.0
        %324 = vmatprep.subr.mxu0 0.0
        %325 = vmatpush1.msra.mxu0 0.0
        %326 = vmatprep.subr.mxu0 0.0
        %327 = vmatpush1.msra.mxu0 0.0
        %328 = vmatprep.subr.mxu0 0.0
        %329 = vmatpush1.msra.mxu0 0.0
        %330 = vmatprep.subr.mxu0 0.0
        %331 = vmatpush1.msra.mxu0 0.0
        %332 = vmatprep.subr.mxu0 0.0
        %333 = vmatpush1.msra.mxu0 0.0
        %334 = vmatprep.subr.mxu0 0.0
        %335 = vmatpush1.msra.mxu0 0.0
        %336 = vmatprep.subr.mxu0 0.0
        %337 = vmatpush1.msra.mxu0 0.0
        %338 = vmatprep.subr.mxu0 0.0
        %339 = vmatpush1.msra.mxu0 0.0
        %340 = vmatprep.subr.mxu0 0.0
        %341 = vmatpush1.msra.mxu0 0.0
        %342 = vmatprep.subr.mxu0 0.0
        %343 = vmatpush1.msra.mxu0 0.0
        %344 = vmatprep.subr.mxu0 0.0
        %345 = vmatpush1.msra.mxu0 0.0
        %346 = vmatprep.subr.mxu0 0.0
        %347 = vmatpush1.msra.mxu0 0.0
        %348 = vmatprep.subr.mxu0 0.0
        %349 = vmatpush1.msra.mxu0 0.0
        %350 = vmatprep.subr.mxu0 0.0
        %351 = vmatpush1.msra.mxu0 0.0
        %352 = vmatprep.subr.mxu0 0.0
        %353 = vmatpush1.msra.mxu0 0.0
        %354 = vmatprep.subr.mxu0 0.0
        %355 = vmatpush1.msra.mxu0 0.0
        %356 = vmatprep.subr.mxu0 0.0
        %357 = vmatpush1.msra.mxu0 0.0
        %358 = vmatprep.subr.mxu0 0.0
        %359 = vmatpush1.msra.mxu0 0.0
        %360 = vmatprep.subr.mxu0 0.0
        %361 = vmatpush1.msra.mxu0 0.0
        %362 = vmatprep.subr.mxu0 0.0
        %363 = vmatpush1.msra.mxu0 0.0
        %364 = vmatprep.subr.mxu0 0.0
        %365 = vmatpush1.msra.mxu0 0.0
        %366 = vmatprep.subr.mxu0 0.0
        %367 = vmatpush1.msra.mxu0 0.0
        %368 = vmatprep.subr.mxu0 0.0
        %369 = vmatpush1.msra.mxu0 0.0
        %370 = vmatprep.mubr.f32.mxu0 0.0
        %371 = vmatmul.mubr.f32.gmra.mrb[0].mxu0 %v301
        %v372 = vpop.f32.mrb[0].mxu0
        %v373 = vadd.f32 0.0, %v372
        %v374 = vpop.f32.mrb[0].mxu0
        %375 = vmatprep.mubr.f32.mxu0 0.0
        %376 = vmatmul.mubr.f32.gmra.mrb[0].mxu0 %v304
        %v377 = vpop.f32.mrb[0].mxu0
        %v378 = vadd.f32 0.0, %v377
        %v379 = vpop.f32.mrb[0].mxu0
        %380 = vdwg.mxu0
        %381 = vst.msk [vmem:[%s277] sm:$0xff] %vm299, %v373
        %382 = vst.msk [vmem:[%s277 + $0x8] sm:$0xff] %vm299, %v378
        %385 = vrot.lane.b32.xlu0 %v373, 96
        %v386 = vpop.permute.xlu0 %385
        %387 = vrot.lane.b32.xlu0 %v378, 96
        %v388 = vpop.permute.xlu0 %387
        %391 = vst.msk [vmem:[%s291] sm:$0xff] %vm299, %v386
        %392 = vst.msk [vmem:[%s291 + $0x8] sm:$0xff] %vm299, %v388
        %s393 = smul.u32 2, %s25
        %p394 = scmp.lt.s32.totalorder %s24, 1
        %s395 = scalar_select %p394, %s24, 1
        %p396 = scmp.lt.s32.totalorder %s26, 0
        %s397 = scalar_select %p396, %s26, 0
        %p398 = scmp.lt.s32.totalorder %s393, 1
        %s399 = scalar_select %p398, %s393, 1
        %s400 = smul.addr %s397, 2
        %s401 = sadd.s32 %s399, %s400
        %s402 = smul.addr %s395, 2
        %s403 = sadd.s32 %s401, %s402
        %s404 = smul.addr %s403, 8
        %s405 = scalar_lea.vmem %s2, %s404
        %s406 = smul.u32 2, %s25
        %p407 = scmp.lt.s32.totalorder %s24, 1
        %s408 = scalar_select %p407, %s24, 1
        %p409 = scmp.lt.s32.totalorder %s26, 0
        %s410 = scalar_select %p409, %s26, 0
        %p411 = scmp.lt.s32.totalorder %s406, 1
        %s412 = scalar_select %p411, %s406, 1
        %s413 = smul.addr %s410, 2
        %s414 = sadd.s32 %s412, %s413
        %s415 = smul.addr %s408, 2
        %s416 = sadd.s32 %s414, %s415
        %s417 = smul.addr %s416, 8
        %s418 = scalar_lea.vmem %s3, %s417
        // Predicated region
        $region37: #{t5_layer_cross_attention.2} parent=27 // pred_check
          %p419 = pneg %p114
        $region38: #{t5_layer_cross_attention.2} parent=27 // pred_check_branch
          %421 = sbr.rel (%p419) target = $region40
        $region39: #{t5_layer_cross_attention.2} parent=27 // pred_region
          %s422 = smul.u32 2, %s25
        $region40: #{t5_layer_cross_attention.2} parent=27 // pred_fallthru
          _
        // Predicated region
        $region41: #{t5_layer_cross_attention.2} parent=27 // pred_check
          %p423 = pneg %p144
        $region42: #{t5_layer_cross_attention.2} parent=27 // pred_check_branch
          %425 = sbr.rel (%p423) target = $region44
        $region43: #{t5_layer_cross_attention.2} parent=27 // pred_region
          %s426 = smul.u32 2, %s25
        $region44: #{t5_layer_cross_attention.2} parent=27 // pred_fallthru
          _
      $region28: #{t5_layer_cross_attention.2} parent=5 // pred_fallthru
        _
      %p427 = scmp.le.s32.totalorder 2, %s14
      // Predicated region
      $region45: #{t5_layer_cross_attention.2} parent=5 // pred_check
        %p428 = pneg %p427
      $region46: #{t5_layer_cross_attention.2} parent=5 // pred_check_branch
        %430 = sbr.rel (%p428) target = $region48
      $region47: #{t5_layer_cross_attention.2} parent=5 // pred_region
        %s431 = ssub.s32 %s14, 2
        // Predicated region
        $region49: #{t5_layer_cross_attention.2} parent=47 // pred_check
          %p432 = pneg %p120
        $region50: #{t5_layer_cross_attention.2} parent=47 // pred_check_branch
          %434 = sbr.rel (%p432) target = $region52
        $region51: #{t5_layer_cross_attention.2} parent=47 // pred_region
          %s435 = smul.u32 2, %s28
          %p436 = scmp.lt.s32.totalorder %s27, 1
          %s437 = scalar_select %p436, %s27, 1
          %p438 = scmp.lt.s32.totalorder %s29, 0
          %s439 = scalar_select %p438, %s29, 0
          %p440 = scmp.lt.s32.totalorder %s435, 1
          %s441 = scalar_select %p440, %s435, 1
          %s442 = smul.addr %s439, 2
          %s443 = sadd.s32 %s441, %s442
          %s444 = smul.addr %s437, 2
          %s445 = sadd.s32 %s443, %s444
          %s446 = smul.addr %s445, 8
          %s447 = scalar_lea.vmem %s2, %s446
        $region52: #{t5_layer_cross_attention.2} parent=47 // pred_fallthru
          _
        // Predicated region
        $region53: #{t5_layer_cross_attention.2} parent=47 // pred_check
          %p448 = pneg %p150
        $region54: #{t5_layer_cross_attention.2} parent=47 // pred_check_branch
          %450 = sbr.rel (%p448) target = $region56
        $region55: #{t5_layer_cross_attention.2} parent=47 // pred_region
          %s451 = smul.u32 2, %s28
          %p452 = scmp.lt.s32.totalorder %s27, 1
          %s453 = scalar_select %p452, %s27, 1
          %p454 = scmp.lt.s32.totalorder %s29, 0
          %s455 = scalar_select %p454, %s29, 0
          %p456 = scmp.lt.s32.totalorder %s451, 1
          %s457 = scalar_select %p456, %s451, 1
          %s458 = smul.addr %s455, 2
          %s459 = sadd.s32 %s457, %s458
          %s460 = smul.addr %s453, 2
          %s461 = sadd.s32 %s459, %s460
          %s462 = smul.addr %s461, 8
          %s463 = scalar_lea.vmem %s3, %s462
        $region56: #{t5_layer_cross_attention.2} parent=47 // pred_fallthru
          _
      $region48: #{t5_layer_cross_attention.2} parent=5 // pred_fallthru
        _
    $region6: #{t5_layer_cross_attention.2} parent=1 // loop_footer
      %s18 = sadd.s32 1, %s14
    $region7: #{t5_layer_cross_attention.2} parent=1 // loop_footer_branch
      %13 = sbr.rel target = $region3
    $region8: #{t5_layer_cross_attention.2} parent=1 // loop_exit
      _
    %464 = vsyncpa [#allocation3], 1
    %s465 = scalar_lea.sflag [#allocation3], 1
    %466 = vsyncpa %s465, 1
    %467 = vsyncpa [#allocation5], 1

// kernel: t5_layer_cross_attention.3
$region0: #{t5_layer_cross_attention.3}
  #allocation0 [shape = 'u32[]', space=smem, size = 0x4, offset = 0x4, fixed_abs, tag = 'smem constant byte address 0x4 - core index']
  #allocation1 [shape = 'u32[144,128]{1,0:T(1,128)}', space=vmem, size = 0x12000, scoped, tag = 'internal scratch']
  #allocation2 [shape = 'f32[8,32]{1,0:T(8,128)}', space=vmem, size = 0x1000, scoped, tag = 'scratch operand']
  #allocation3 [shape = 'f32[8,32]{1,0:T(8,128)}', space=vmem, size = 0x1000, scoped, tag = 'scratch operand']
  %s0 = inlined_call_operand.hbm [shape: f32[2,8,32], index: 0, kind: input, shape index: {}]
  %s1 = inlined_call_operand.vmem [shape: f32[1,32], index: 1, kind: input, shape index: {}]
  %s2 = inlined_call_operand.vmem [shape: f32[1,32,32], index: 2, kind: input, shape index: {}]
  %s3 = inlined_call_operand.vmem [shape: f32[2,1,16,32], index: 3, kind: input, shape index: {}]
  %s4 = inlined_call_operand.vmem [shape: f32[2,1,16,32], index: 4, kind: input, shape index: {}]
  %s5 = inlined_call_operand.vmem [shape: f32[1,32,32], index: 5, kind: input, shape index: {}]
  %s6 = inlined_call_operand.hbm [shape: f32[2,8,32], index: 6, kind: output, shape index: {}]
  %s7 = sld [smem:[#allocation0]]
  $region69: #{t5_layer_cross_attention.3} parent=0
    _
  %s9 = ssub.s32 1, %s7
  %s10 = scalar_select 0, %s9, %s7
  $region1: #{t5_layer_cross_attention.3} parent=0
    #allocation4 [shape = 'u8[8192]{0}', space=vmem, size = 0x2000, scoped, tag = 'input window, operand 0']
    #allocation5 [shape = 's32[2]{0}', space=sflag, size = 0x8, scoped, tag = 'scoped memory for t5_layer_cross_attention.3']
    #allocation6 [shape = 's32[2]{0}', space=sflag, size = 0x8, scoped, tag = 'scoped memory for t5_layer_cross_attention.3']
    #allocation7 [shape = 'u8[8192]{0}', space=vmem, size = 0x2000, scoped, tag = 'output window, operand 0']
    %11 = vsyncpa [#allocation5], 0
    %s12 = scalar_lea.sflag [#allocation5], 1
    %13 = vsyncpa %s12, 0
    %14 = vsyncpa [#allocation6], 0
    %s15 = scalar_lea.sflag [#allocation6], 1
    %16 = vsyncpa %s15, 0
    loop: start=0, step=1, limit=4
    $region2: #{t5_layer_cross_attention.3} parent=1 // loop_pre_header
      _
    $region3: #{t5_layer_cross_attention.3} parent=1 // loop_header
      %s18 = sphi 0, %s22
      %p19 = scmp.ge.s32.totalorder %s18, 4
      %s25 = sphi 0, %s44
      %s26 = sphi 0, %s40
      %s27 = sphi 0, %s36
      %s28 = sphi 0, %s25
      %s29 = sphi 0, %s26
      %s30 = sphi 0, %s27
      %s31 = sphi 0, %s28
      %s32 = sphi 0, %s29
      %s33 = sphi 0, %s30
      %s49 = sphi 0, %s51
      %s52 = sphi 0, %s49
      %s53 = sphi 0, %s52
      %s69 = sphi 0, %s53
      %s73 = sphi 0, %s73
      %s75 = sphi 0, %s73
      %s76 = sphi 0, %s75
      %s90 = sphi 0, %s76
      %s96 = sphi 0, %s98
      %s99 = sphi 0, %s96
      %s100 = sphi 0, %s99
      %s116 = sphi 0, %s100
      %s124 = sphi 0, %s126
      %s127 = sphi 0, %s124
      %s128 = sphi 0, %s127
      %s144 = sphi 0, %s128
      %s152 = sphi 0, %s154
      %s155 = sphi 0, %s152
      %s156 = sphi 0, %s155
      %s172 = sphi 0, %s156
      %s178 = sphi 0, %s180
      %s181 = sphi 0, %s178
      %s182 = sphi 0, %s181
      %s198 = sphi 0, %s182
      %s206 = sphi 0, %s208
      %s209 = sphi 0, %s206
      %s210 = sphi 0, %s209
      %s226 = sphi 0, %s210
    $region4: #{t5_layer_cross_attention.3} parent=1 // loop_header_branch
      %21 = sbr.rel (%p19) target = $region8
    $region5: #{t5_layer_cross_attention.3} parent=1 // loop_body
      %s23 = ssub.s32 %s18, 1
      %s24 = ssub.s32 %s18, 2
      %s34 = sadd.s32 1, %s27
      %p35 = scmp.ge.s32.totalorder %s34, 1
      %s36 = scalar_select %p35, 0, %s34
      %s37 = sadd.s32 1, %s26
      %s38 = scalar_select %p35, %s37, %s26
      %p39 = scmp.ge.s32.totalorder %s38, 1
      %s40 = scalar_select %p39, 0, %s38
      %s41 = sadd.s32 1, %s25
      %s42 = scalar_select %p39, %s41, %s25
      %p43 = scmp.ge.s32.totalorder %s42, 2
      %s44 = scalar_select %p43, 0, %s42
      %s45 = ssub.s32 %s25, %s44
      %s46 = ssub.s32 %s26, %s40
      %s47 = sor.u32 %s45, %s46
      %p48 = scmp.eq.s32.totalorder %s47, 0
      %s50 = sadd.s32 %s49, 1
      %s51 = scalar_select %p48, %s49, %s50
      %p54 = pneg %p48
      %p55 = scmp.eq.s32.totalorder %s18, 1
      %p56 = por %p54, %p55
      %p57 = scmp.ne.s32.totalorder %s49, %s52
      %p58 = scmp.eq.s32.totalorder %s18, 0
      %p59 = por %p57, %p58
      %p60 = scmp.ne.s32.totalorder %s49, %s52
      %p61 = scmp.eq.s32.totalorder %s23, 1
      %p62 = por %p60, %p61
      %p63 = scmp.ne.s32.totalorder %s52, %s53
      %p64 = scmp.eq.s32.totalorder %s23, 0
      %p65 = por %p63, %p64
      %p66 = scmp.ne.s32.totalorder %s52, %s53
      %p67 = scmp.eq.s32.totalorder %s24, 1
      %p68 = por %p66, %p67
      %p70 = scmp.ne.s32.totalorder %s53, %s69
      %p71 = scmp.eq.s32.totalorder %s24, 0
      %p72 = por %p70, %p71
      %s74 = sadd.s32 %s73, 1
      %p77 = scmp.eq.s32.totalorder %s18, 1
      %p78 = scmp.ne.s32.totalorder %s73, %s75
      %p79 = scmp.eq.s32.totalorder %s18, 0
      %p80 = por %p78, %p79
      %p81 = scmp.ne.s32.totalorder %s73, %s75
      %p82 = scmp.eq.s32.totalorder %s23, 1
      %p83 = por %p81, %p82
      %p84 = scmp.ne.s32.totalorder %s75, %s76
      %p85 = scmp.eq.s32.totalorder %s23, 0
      %p86 = por %p84, %p85
      %p87 = scmp.ne.s32.totalorder %s75, %s76
      %p88 = scmp.eq.s32.totalorder %s24, 1
      %p89 = por %p87, %p88
      %p91 = scmp.ne.s32.totalorder %s76, %s90
      %p92 = scmp.eq.s32.totalorder %s24, 0
      %p93 = por %p91, %p92
      %s94 = ssub.s32 %s27, %s36
      %p95 = scmp.eq.s32.totalorder %s94, 0
      %s97 = sadd.s32 %s96, 1
      %s98 = scalar_select %p95, %s96, %s97
      %p101 = pneg %p95
      %p102 = scmp.eq.s32.totalorder %s18, 1
      %p103 = por %p101, %p102
      %p104 = scmp.ne.s32.totalorder %s96, %s99
      %p105 = scmp.eq.s32.totalorder %s18, 0
      %p106 = por %p104, %p105
      %p107 = scmp.ne.s32.totalorder %s96, %s99
      %p108 = scmp.eq.s32.totalorder %s23, 1
      %p109 = por %p107, %p108
      %p110 = scmp.ne.s32.totalorder %s99, %s100
      %p111 = scmp.eq.s32.totalorder %s23, 0
      %p112 = por %p110, %p111
      %p113 = scmp.ne.s32.totalorder %s99, %s100
      %p114 = scmp.eq.s32.totalorder %s24, 1
      %p115 = por %p113, %p114
      %p117 = scmp.ne.s32.totalorder %s100, %s116
      %p118 = scmp.eq.s32.totalorder %s24, 0
      %p119 = por %p117, %p118
      %s120 = ssub.s32 %s25, %s44
      %s121 = ssub.s32 %s27, %s36
      %s122 = sor.u32 %s120, %s121
      %p123 = scmp.eq.s32.totalorder %s122, 0
      %s125 = sadd.s32 %s124, 1
      %s126 = scalar_select %p123, %s124, %s125
      %p129 = pneg %p123
      %p130 = scmp.eq.s32.totalorder %s18, 1
      %p131 = por %p129, %p130
      %p132 = scmp.ne.s32.totalorder %s124, %s127
      %p133 = scmp.eq.s32.totalorder %s18, 0
      %p134 = por %p132, %p133
      %p135 = scmp.ne.s32.totalorder %s124, %s127
      %p136 = scmp.eq.s32.totalorder %s23, 1
      %p137 = por %p135, %p136
      %p138 = scmp.ne.s32.totalorder %s127, %s128
      %p139 = scmp.eq.s32.totalorder %s23, 0
      %p140 = por %p138, %p139
      %p141 = scmp.ne.s32.totalorder %s127, %s128
      %p142 = scmp.eq.s32.totalorder %s24, 1
      %p143 = por %p141, %p142
      %p145 = scmp.ne.s32.totalorder %s128, %s144
      %p146 = scmp.eq.s32.totalorder %s24, 0
      %p147 = por %p145, %p146
      %s148 = ssub.s32 %s25, %s44
      %s149 = ssub.s32 %s27, %s36
      %s150 = sor.u32 %s148, %s149
      %p151 = scmp.eq.s32.totalorder %s150, 0
      %s153 = sadd.s32 %s152, 1
      %s154 = scalar_select %p151, %s152, %s153
      %p157 = pneg %p151
      %p158 = scmp.eq.s32.totalorder %s18, 1
      %p159 = por %p157, %p158
      %p160 = scmp.ne.s32.totalorder %s152, %s155
      %p161 = scmp.eq.s32.totalorder %s18, 0
      %p162 = por %p160, %p161
      %p163 = scmp.ne.s32.totalorder %s152, %s155
      %p164 = scmp.eq.s32.totalorder %s23, 1
      %p165 = por %p163, %p164
      %p166 = scmp.ne.s32.totalorder %s155, %s156
      %p167 = scmp.eq.s32.totalorder %s23, 0
      %p168 = por %p166, %p167
      %p169 = scmp.ne.s32.totalorder %s155, %s156
      %p170 = scmp.eq.s32.totalorder %s24, 1
      %p171 = por %p169, %p170
      %p173 = scmp.ne.s32.totalorder %s156, %s172
      %p174 = scmp.eq.s32.totalorder %s24, 0
      %p175 = por %p173, %p174
      %s176 = ssub.s32 %s27, %s36
      %p177 = scmp.eq.s32.totalorder %s176, 0
      %s179 = sadd.s32 %s178, 1
      %s180 = scalar_select %p177, %s178, %s179
      %p183 = pneg %p177
      %p184 = scmp.eq.s32.totalorder %s18, 1
      %p185 = por %p183, %p184
      %p186 = scmp.ne.s32.totalorder %s178, %s181
      %p187 = scmp.eq.s32.totalorder %s18, 0
      %p188 = por %p186, %p187
      %p189 = scmp.ne.s32.totalorder %s178, %s181
      %p190 = scmp.eq.s32.totalorder %s23, 1
      %p191 = por %p189, %p190
      %p192 = scmp.ne.s32.totalorder %s181, %s182
      %p193 = scmp.eq.s32.totalorder %s23, 0
      %p194 = por %p192, %p193
      %p195 = scmp.ne.s32.totalorder %s181, %s182
      %p196 = scmp.eq.s32.totalorder %s24, 1
      %p197 = por %p195, %p196
      %p199 = scmp.ne.s32.totalorder %s182, %s198
      %p200 = scmp.eq.s32.totalorder %s24, 0
      %p201 = por %p199, %p200
      %s202 = ssub.s32 %s25, %s44
      %s203 = ssub.s32 %s26, %s40
      %s204 = sor.u32 %s202, %s203
      %p205 = scmp.eq.s32.totalorder %s204, 0
      %s207 = sadd.s32 %s206, 1
      %s208 = scalar_select %p205, %s206, %s207
      %p211 = pneg %p205
      %p212 = scmp.eq.s32.totalorder %s18, 1
      %p213 = por %p211, %p212
      %p214 = scmp.ne.s32.totalorder %s206, %s209
      %p215 = scmp.eq.s32.totalorder %s18, 0
      %p216 = por %p214, %p215
      %p217 = scmp.ne.s32.totalorder %s206, %s209
      %p218 = scmp.eq.s32.totalorder %s23, 1
      %p219 = por %p217, %p218
      %p220 = scmp.ne.s32.totalorder %s209, %s210
      %p221 = scmp.eq.s32.totalorder %s23, 0
      %p222 = por %p220, %p221
      %p223 = scmp.ne.s32.totalorder %s209, %s210
      %p224 = scmp.eq.s32.totalorder %s24, 1
      %p225 = por %p223, %p224
      %p227 = scmp.ne.s32.totalorder %s210, %s226
      %p228 = scmp.eq.s32.totalorder %s24, 0
      %p229 = por %p227, %p228
      %p230 = scmp.le.s32.totalorder 1, %s18
      %p231 = scmp.lt.s32.totalorder %s18, 3
      %p232 = pnand %p230, %p231
      %p233 = pneg %p232
      // Predicated region
      $region9: #{t5_layer_cross_attention.3} parent=5 // pred_check
        _
      $region10: #{t5_layer_cross_attention.3} parent=5 // pred_check_branch
        %235 = sbr.rel (%p232) target = $region12
      $region11: #{t5_layer_cross_attention.3} parent=5 // pred_region
        %s236 = ssub.s32 %s18, 1
        // Predicated region
        $region13: #{t5_layer_cross_attention.3} parent=11 // pred_check
          %p237 = pneg %p86
        $region14: #{t5_layer_cross_attention.3} parent=11 // pred_check_branch
          %239 = sbr.rel (%p237) target = $region16
        $region15: #{t5_layer_cross_attention.3} parent=11 // pred_region
          _
        $region16: #{t5_layer_cross_attention.3} parent=11 // pred_fallthru
          _
        // Predicated region
        $region17: #{t5_layer_cross_attention.3} parent=11 // pred_check
          %p240 = pneg %p112
        $region18: #{t5_layer_cross_attention.3} parent=11 // pred_check_branch
          %242 = sbr.rel (%p240) target = $region20
        $region19: #{t5_layer_cross_attention.3} parent=11 // pred_region
          %p243 = scmp.lt.s32.totalorder %s30, 0
          %s244 = scalar_select %p243, %s30, 0
          %s245 = smul.addr %s244, 4
          %s246 = smul.addr %s245, 8
          %s247 = scalar_lea.vmem %s2, %s246
        $region20: #{t5_layer_cross_attention.3} parent=11 // pred_fallthru
          _
        // Predicated region
        $region21: #{t5_layer_cross_attention.3} parent=11 // pred_check
          %p248 = pneg %p194
        $region22: #{t5_layer_cross_attention.3} parent=11 // pred_check_branch
          %250 = sbr.rel (%p248) target = $region24
        $region23: #{t5_layer_cross_attention.3} parent=11 // pred_region
          %p251 = scmp.lt.s32.totalorder %s30, 0
          %s252 = scalar_select %p251, %s30, 0
          %s253 = smul.addr %s252, 4
          %s254 = smul.addr %s253, 8
          %s255 = scalar_lea.vmem %s5, %s254
        $region24: #{t5_layer_cross_attention.3} parent=11 // pred_fallthru
          _
      $region12: #{t5_layer_cross_attention.3} parent=5 // pred_fallthru
        _
      %p256 = scmp.lt.s32.totalorder %s18, 2
      // Predicated region
      $region25: #{t5_layer_cross_attention.3} parent=5 // pred_check
        %p257 = pneg %p256
      $region26: #{t5_layer_cross_attention.3} parent=5 // pred_check_branch
        %259 = sbr.rel (%p257) target = $region28
      $region27: #{t5_layer_cross_attention.3} parent=5 // pred_region
        // Predicated region
        $region29: #{t5_layer_cross_attention.3} parent=27 // pred_check
          %p260 = pneg %p59
        $region30: #{t5_layer_cross_attention.3} parent=27 // pred_check_branch
          %262 = sbr.rel (%p260) target = $region32
        $region31: #{t5_layer_cross_attention.3} parent=27 // pred_region
          %s263 = sand.u32 %s49, 1
          %s264 = scalar_lea.sflag [#allocation5], %s263
          %s265 = sand.u32 %s49, 1
          %s266 = smul.addr %s265, 8
          %s267 = scalar_lea.vmem [#allocation4], %s266
          %s269 = ssub.s32 128, 128
          %270 = vsyncadd %s264, %s269
          %s271 = sadd.s32 %s26, %s25
          %s272 = smul.addr %s271, 128
          %s273 = scalar_lea.hbm %s0, %s272
          %s275 = sshll.u32 %s267, 4
          %s276 = int_to_ptr.vmem [resolvable:$true] %s275
          %278 = dma.hbm_to_vmem [thread:$0]  %s273, 128, %s276, %s264
        $region32: #{t5_layer_cross_attention.3} parent=27 // pred_fallthru
          _
        // Predicated region
        $region33: #{t5_layer_cross_attention.3} parent=27 // pred_check
          %p279 = pneg %p134
        $region34: #{t5_layer_cross_attention.3} parent=27 // pred_check_branch
          %281 = sbr.rel (%p279) target = $region36
        $region35: #{t5_layer_cross_attention.3} parent=27 // pred_region
          %p282 = scmp.lt.s32.totalorder %s25, 1
          %s283 = scalar_select %p282, %s25, 1
          %p284 = scmp.lt.s32.totalorder %s27, 0
          %s285 = scalar_select %p284, %s27, 0
          %s286 = smul.addr %s285, 2
          %s287 = smul.addr %s283, 2
          %s288 = sadd.s32 %s286, %s287
          %s289 = smul.addr %s288, 8
          %s290 = scalar_lea.vmem %s3, %s289
        $region36: #{t5_layer_cross_attention.3} parent=27 // pred_fallthru
          _
        // Predicated region
        $region37: #{t5_layer_cross_attention.3} parent=27 // pred_check
          %p291 = pneg %p162
        $region38: #{t5_layer_cross_attention.3} parent=27 // pred_check_branch
          %293 = sbr.rel (%p291) target = $region40
        $region39: #{t5_layer_cross_attention.3} parent=27 // pred_region
          %p294 = scmp.lt.s32.totalorder %s25, 1
          %s295 = scalar_select %p294, %s25, 1
          %p296 = scmp.lt.s32.totalorder %s27, 0
          %s297 = scalar_select %p296, %s27, 0
          %s298 = smul.addr %s297, 2
          %s299 = smul.addr %s295, 2
          %s300 = sadd.s32 %s298, %s299
          %s301 = smul.addr %s300, 8
          %s302 = scalar_lea.vmem %s4, %s301
        $region40: #{t5_layer_cross_attention.3} parent=27 // pred_fallthru
          _
      $region28: #{t5_layer_cross_attention.3} parent=5 // pred_fallthru
        _
      %p303 = scmp.le.s32.totalorder 1, %s18
      %p304 = scmp.lt.s32.totalorder %s18, 3
      %p305 = pnand %p303, %p304
      %p306 = pneg %p305
      // Predicated region
      $region41: #{t5_layer_cross_attention.3} parent=5 // pred_check
        _
      $region42: #{t5_layer_cross_attention.3} parent=5 // pred_check_branch
        %308 = sbr.rel (%p305) target = $region44
      $region43: #{t5_layer_cross_attention.3} parent=5 // pred_region
        %s309 = ssub.s32 %s18, 1
        %s310 = sand.u32 %s52, 1
        %s311 = scalar_lea.sflag [#allocation5], %s310
        %s312 = sand.u32 %s52, 1
        %s313 = smul.addr %s312, 8
        %s314 = scalar_lea.vmem [#allocation4], %s313
        // Predicated region
        $region45: #{t5_layer_cross_attention.3} parent=43 // pred_check
          %p315 = pneg %p65
        $region46: #{t5_layer_cross_attention.3} parent=43 // pred_check_branch
          %317 = sbr.rel (%p315) target = $region48
        $region47: #{t5_layer_cross_attention.3} parent=43 // pred_region
          %318 = dma.done %s311, 128
        $region48: #{t5_layer_cross_attention.3} parent=43 // pred_fallthru
          _
        %s319 = sand.u32 %s52, 1
        %s320 = scalar_lea.sflag [#allocation5], %s319
        %s321 = sand.u32 %s52, 1
        %s322 = smul.addr %s321, 8
        %s323 = scalar_lea.vmem [#allocation4], %s322
        %p324 = pneg %p65
        %p325 = pneg %p62
        %p326 = pneg %p86
        %p327 = pneg %p83
        %p328 = scmp.lt.s32.totalorder %s30, 0
        %s329 = scalar_select %p328, %s30, 0
        %s330 = smul.addr %s329, 4
        %s331 = smul.addr %s330, 8
        %s332 = scalar_lea.vmem %s2, %s331
        %p333 = pneg %p112
        %p334 = pneg %p109
        %p335 = scmp.lt.s32.totalorder %s28, 1
        %s336 = scalar_select %p335, %s28, 1
        %p337 = scmp.lt.s32.totalorder %s30, 0
        %s338 = scalar_select %p337, %s30, 0
        %s339 = smul.addr %s338, 2
        %s340 = smul.addr %s336, 2
        %s341 = sadd.s32 %s339, %s340
        %s342 = smul.addr %s341, 8
        %s343 = scalar_lea.vmem %s3, %s342
        %p344 = pneg %p140
        %p345 = pneg %p137
        %p346 = scmp.lt.s32.totalorder %s28, 1
        %s347 = scalar_select %p346, %s28, 1
        %p348 = scmp.lt.s32.totalorder %s30, 0
        %s349 = scalar_select %p348, %s30, 0
        %s350 = smul.addr %s349, 2
        %s351 = smul.addr %s347, 2
        %s352 = sadd.s32 %s350, %s351
        %s353 = smul.addr %s352, 8
        %s354 = scalar_lea.vmem %s4, %s353
        %p355 = pneg %p168
        %p356 = pneg %p165
        %p357 = scmp.lt.s32.totalorder %s30, 0
        %s358 = scalar_select %p357, %s30, 0
        %s359 = smul.addr %s358, 4
        %s360 = smul.addr %s359, 8
        %s361 = scalar_lea.vmem %s5, %s360
        %p362 = pneg %p194
        %p363 = pneg %p191
        %p364 = pneg %p222
        %p365 = pneg %p219
        %s366 = sand.u32 %s209, 1
        %s367 = scalar_lea.sflag [#allocation6], %s366
        %s368 = sand.u32 %s209, 1
        %s369 = smul.addr %s368, 8
        %s370 = scalar_lea.vmem [#allocation7], %s369
        %p371 = scmp.lt.s32.totalorder %s30, 0
        %s372 = scalar_select %p371, %s30, 0
        %s373 = smul.addr %s372, 4
        %s374 = smul.addr %s373, 8
        %s375 = scalar_lea.vmem %s2, %s374
        %p376 = scmp.lt.s32.totalorder %s28, 1
        %s377 = scalar_select %p376, %s28, 1
        %p378 = scmp.lt.s32.totalorder %s30, 0
        %s379 = scalar_select %p378, %s30, 0
        %s380 = smul.addr %s379, 2
        %s381 = smul.addr %s377, 2
        %s382 = sadd.s32 %s380, %s381
        %s383 = smul.addr %s382, 8
        %s384 = scalar_lea.vmem %s3, %s383
        %p385 = scmp.lt.s32.totalorder %s28, 1
        %s386 = scalar_select %p385, %s28, 1
        %p387 = scmp.lt.s32.totalorder %s30, 0
        %s388 = scalar_select %p387, %s30, 0
        %s389 = smul.addr %s388, 2
        %s390 = smul.addr %s386, 2
        %s391 = sadd.s32 %s389, %s390
        %s392 = smul.addr %s391, 8
        %s393 = scalar_lea.vmem %s4, %s392
        %p394 = scmp.lt.s32.totalorder %s30, 0
        %s395 = scalar_select %p394, %s30, 0
        %s396 = smul.addr %s395, 4
        %s397 = smul.addr %s396, 8
        %s398 = scalar_lea.vmem %s5, %s397
        %p399 = scmp.eq.s32.totalorder %s30, 0
        // Predicated region
        $region49: #{t5_layer_cross_attention.3} parent=43 // pred_check
          %p400 = pneg %p399
        $region50: #{t5_layer_cross_attention.3} parent=43 // pred_check_branch
          %402 = sbr.rel (%p400) target = $region52
        $region51: #{t5_layer_cross_attention.3} parent=43 // pred_region
          %v403 = vld [vmem:[%s314] sm:$0xff]
          %v404 = vmul.f32 %v403, %v403
          %vm405 = vcmask 261120
          %v406 = vsel %vm405, %v404, 0.0
          %407 = vadd.xlane.f32.xlu0 %v406
          %v408 = vpop.xlane.xlu0 %407
          %v409 = vrcp.pop 32.0
          %v410 = vmul.f32 %v408, %v409
          %v411 = vld [vmem:[%s1] sm:$0x1]
          %v412 = vadd.f32 %v410, 1e-06
          %v413 = vrsqrt.pop %v412
          %v414 = vmul.f32 %v403, %v413
          %v416 = vlaneseq
          %v417 = vshrl.u32 %v416, 7
          %v418 = vsub.s32 0, %v417
          %v419 = vrot.slane %v411, %v418
          %v421 = vmul.f32 %v419, %v414
          %422 = vst.msk [vmem:[#allocation2] sm:$0xff] %vm405, %v421
          %423 = vst.msk [vmem:[#allocation3] sm:$0xff] %vm405, %v403
        $region52: #{t5_layer_cross_attention.3} parent=43 // pred_fallthru
          _
        %v424 = vld [vmem:[#allocation2] sm:$0xff]
        %v425 = vld [vmem:[%s375] sm:$0xff]
        %v426 = vld [vmem:[%s375 + $0x8] sm:$0xff]
        %v427 = vld [vmem:[%s375 + $0x10] sm:$0xff]
        %v428 = vld [vmem:[%s375 + $0x18] sm:$0xff]
        %vm429 = vcmask 261120
        %v431 = vsel %vm429, %v424, 0
        %433 = vmatprep.subr.mxu0 0.0
        %434 = vmatpush1.msra.mxu0 %v425
        %435 = vmatprep.subr.mxu0 0.0
        %436 = vmatpush1.msra.mxu0 %v426
        %437 = vmatprep.subr.mxu0 0.0
        %438 = vmatpush1.msra.mxu0 %v427
        %439 = vmatprep.subr.mxu0 0.0
        %440 = vmatpush1.msra.mxu0 %v428
        %441 = vmatprep.subr.mxu0 0.0
        %442 = vmatpush1.msra.mxu0 0.0
        %443 = vmatprep.subr.mxu0 0.0
        %444 = vmatpush1.msra.mxu0 0.0
        %445 = vmatprep.subr.mxu0 0.0
        %446 = vmatpush1.msra.mxu0 0.0
        %447 = vmatprep.subr.mxu0 0.0
        %448 = vmatpush1.msra.mxu0 0.0
        %449 = vmatprep.subr.mxu0 0.0
        %450 = vmatpush1.msra.mxu0 0.0
        %451 = vmatprep.subr.mxu0 0.0
        %452 = vmatpush1.msra.mxu0 0.0
        %453 = vmatprep.subr.mxu0 0.0
        %454 = vmatpush1.msra.mxu0 0.0
        %455 = vmatprep.subr.mxu0 0.0
        %456 = vmatpush1.msra.mxu0 0.0
        %457 = vmatprep.subr.mxu0 0.0
        %458 = vmatpush1.msra.mxu0 0.0
        %459 = vmatprep.subr.mxu0 0.0
        %460 = vmatpush1.msra.mxu0 0.0
        %461 = vmatprep.subr.mxu0 0.0
        %462 = vmatpush1.msra.mxu0 0.0
        %463 = vmatprep.subr.mxu0 0.0
        %464 = vmatpush1.msra.mxu0 0.0
        %465 = vmatprep.subr.mxu0 0.0
        %466 = vmatpush1.msra.mxu0 0.0
        %467 = vmatprep.subr.mxu0 0.0
        %468 = vmatpush1.msra.mxu0 0.0
        %469 = vmatprep.subr.mxu0 0.0
        %470 = vmatpush1.msra.mxu0 0.0
        %471 = vmatprep.subr.mxu0 0.0
        %472 = vmatpush1.msra.mxu0 0.0
        %473 = vmatprep.subr.mxu0 0.0
        %474 = vmatpush1.msra.mxu0 0.0
        %475 = vmatprep.subr.mxu0 0.0
        %476 = vmatpush1.msra.mxu0 0.0
        %477 = vmatprep.subr.mxu0 0.0
        %478 = vmatpush1.msra.mxu0 0.0
        %479 = vmatprep.subr.mxu0 0.0
        %480 = vmatpush1.msra.mxu0 0.0
        %481 = vmatprep.subr.mxu0 0.0
        %482 = vmatpush1.msra.mxu0 0.0
        %483 = vmatprep.subr.mxu0 0.0
        %484 = vmatpush1.msra.mxu0 0.0
        %485 = vmatprep.subr.mxu0 0.0
        %486 = vmatpush1.msra.mxu0 0.0
        %487 = vmatprep.subr.mxu0 0.0
        %488 = vmatpush1.msra.mxu0 0.0
        %489 = vmatprep.subr.mxu0 0.0
        %490 = vmatpush1.msra.mxu0 0.0
        %491 = vmatprep.subr.mxu0 0.0
        %492 = vmatpush1.msra.mxu0 0.0
        %493 = vmatprep.subr.mxu0 0.0
        %494 = vmatpush1.msra.mxu0 0.0
        %495 = vmatprep.subr.mxu0 0.0
        %496 = vmatpush1.msra.mxu0 0.0
        %497 = vmatprep.mubr.f32.mxu0 0.0
        %498 = vmatmul.mubr.f32.gmra.mrb[0].mxu0 %v431
        %v499 = vpop.f32.mrb[0].mxu0
        %v500 = vadd.f32 0.0, %v499
        %v501 = vpop.f32.mrb[0].mxu0
        %502 = vdwg.mxu0
        %v503 = vld [vmem:[%s384] sm:$0xff]
        %v504 = vld [vmem:[%s384 + $0x8] sm:$0xff]
        %v505 = vld [vmem:[%s393] sm:$0xff]
        %v506 = vld [vmem:[%s393 + $0x8] sm:$0xff]
        %vm507 = vcmask 64512
        %v509 = vsel %vm507, %v500, 0
        %v512 = vsel %vm507, %v503, 0
        %v515 = vsel %vm507, %v504, 0
        %517 = vmatprep.subr.mxu0 0.0
        %518 = vmatpush1.xpose.msra.mxu0 %v512
        %519 = vmatprep.subr.mxu0 0.0
        %520 = vmatpush1.xpose.msra.mxu0 %v515
        %521 = vmatprep.subr.mxu0 0.0
        %522 = vmatpush1.xpose.msra.mxu0 0.0
        %523 = vmatprep.subr.mxu0 0.0
        %524 = vmatpush1.xpose.msra.mxu0 0.0
        %525 = vmatprep.subr.mxu0 0.0
        %526 = vmatpush1.xpose.msra.mxu0 0.0
        %527 = vmatprep.subr.mxu0 0.0
        %528 = vmatpush1.xpose.msra.mxu0 0.0
        %529 = vmatprep.subr.mxu0 0.0
        %530 = vmatpush1.xpose.msra.mxu0 0.0
        %531 = vmatprep.subr.mxu0 0.0
        %532 = vmatpush1.xpose.msra.mxu0 0.0
        %533 = vmatprep.subr.mxu0 0.0
        %534 = vmatpush1.xpose.msra.mxu0 0.0
        %535 = vmatprep.subr.mxu0 0.0
        %536 = vmatpush1.xpose.msra.mxu0 0.0
        %537 = vmatprep.subr.mxu0 0.0
        %538 = vmatpush1.xpose.msra.mxu0 0.0
        %539 = vmatprep.subr.mxu0 0.0
        %540 = vmatpush1.xpose.msra.mxu0 0.0
        %541 = vmatprep.subr.mxu0 0.0
        %542 = vmatpush1.xpose.msra.mxu0 0.0
        %543 = vmatprep.subr.mxu0 0.0
        %544 = vmatpush1.xpose.msra.mxu0 0.0
        %545 = vmatprep.subr.mxu0 0.0
        %546 = vmatpush1.xpose.msra.mxu0 0.0
        %547 = vmatprep.subr.mxu0 0.0
        %548 = vmatpush1.xpose.msra.mxu0 0.0
        %549 = vmatprep.subr.mxu0 0.0
        %550 = vmatpush1.xpose.msra.mxu0 0.0
        %551 = vmatprep.subr.mxu0 0.0
        %552 = vmatpush1.xpose.msra.mxu0 0.0
        %553 = vmatprep.subr.mxu0 0.0
        %554 = vmatpush1.xpose.msra.mxu0 0.0
        %555 = vmatprep.subr.mxu0 0.0
        %556 = vmatpush1.xpose.msra.mxu0 0.0
        %557 = vmatprep.subr.mxu0 0.0
        %558 = vmatpush1.xpose.msra.mxu0 0.0
        %559 = vmatprep.subr.mxu0 0.0
        %560 = vmatpush1.xpose.msra.mxu0 0.0
        %561 = vmatprep.subr.mxu0 0.0
        %562 = vmatpush1.xpose.msra.mxu0 0.0
        %563 = vmatprep.subr.mxu0 0.0
        %564 = vmatpush1.xpose.msra.mxu0 0.0
        %565 = vmatprep.subr.mxu0 0.0
        %566 = vmatpush1.xpose.msra.mxu0 0.0
        %567 = vmatprep.subr.mxu0 0.0
        %568 = vmatpush1.xpose.msra.mxu0 0.0
        %569 = vmatprep.subr.mxu0 0.0
        %570 = vmatpush1.xpose.msra.mxu0 0.0
        %571 = vmatprep.subr.mxu0 0.0
        %572 = vmatpush1.xpose.msra.mxu0 0.0
        %573 = vmatprep.subr.mxu0 0.0
        %574 = vmatpush1.xpose.msra.mxu0 0.0
        %575 = vmatprep.subr.mxu0 0.0
        %576 = vmatpush1.xpose.msra.mxu0 0.0
        %577 = vmatprep.subr.mxu0 0.0
        %578 = vmatpush1.xpose.msra.mxu0 0.0
        %579 = vmatprep.subr.mxu0 0.0
        %580 = vmatpush1.xpose.msra.mxu0 0.0
        %581 = vmatprep.mubr.f32.mxu0 0.0
        %582 = vmatmul.mubr.f32.gmra.mrb[0].mxu0 %v509
        %v583 = vpop.f32.mrb[0].mxu0
        %v584 = vadd.f32 0.0, %v583
        %v585 = vpop.f32.mrb[0].mxu0
        %586 = vdwg.mxu0
        %vm587 = vcmask 130048
        %v588 = vsel %vm587, %v584, -inf
        %589 = vmax.xlane.f32.xlu0 %v588
        %v590 = vpop.xlane.xlu0 %589
        %v591 = vsub.f32 %v584, %v590
        %v592 = vmul.f32 %v591, 1.442695
        %v593 = vpow.pop %v592
        %v594 = vsel %vm587, %v593, 0.0
        %595 = vadd.xlane.f32.xlu0 %v594
        %v596 = vpop.xlane.xlu0 %595
        %v598 = vsel %vm587, %v593, 0
        %600 = vmatprep.subr.mxu0 0.0
        %601 = vmatpush1.msra.mxu0 %v505
        %602 = vmatprep.subr.mxu0 0.0
        %603 = vmatpush1.msra.mxu0 %v506
        %604 = vmatprep.subr.mxu0 0.0
        %605 = vmatpush1.msra.mxu0 0.0
        %606 = vmatprep.subr.mxu0 0.0
        %607 = vmatpush1.msra.mxu0 0.0
        %608 = vmatprep.subr.mxu0 0.0
        %609 = vmatpush1.msra.mxu0 0.0
        %610 = vmatprep.subr.mxu0 0.0
        %611 = vmatpush1.msra.mxu0 0.0
        %612 = vmatprep.subr.mxu0 0.0
        %613 = vmatpush1.msra.mxu0 0.0
        %614 = vmatprep.subr.mxu0 0.0
        %615 = vmatpush1.msra.mxu0 0.0
        %616 = vmatprep.subr.mxu0 0.0
        %617 = vmatpush1.msra.mxu0 0.0
        %618 = vmatprep.subr.mxu0 0.0
        %619 = vmatpush1.msra.mxu0 0.0
        %620 = vmatprep.subr.mxu0 0.0
        %621 = vmatpush1.msra.mxu0 0.0
        %622 = vmatprep.subr.mxu0 0.0
        %623 = vmatpush1.msra.mxu0 0.0
        %624 = vmatprep.subr.mxu0 0.0
        %625 = vmatpush1.msra.mxu0 0.0
        %626 = vmatprep.subr.mxu0 0.0
        %627 = vmatpush1.msra.mxu0 0.0
        %628 = vmatprep.subr.mxu0 0.0
        %629 = vmatpush1.msra.mxu0 0.0
        %630 = vmatprep.subr.mxu0 0.0
        %631 = vmatpush1.msra.mxu0 0.0
        %632 = vmatprep.subr.mxu0 0.0
        %633 = vmatpush1.msra.mxu0 0.0
        %634 = vmatprep.subr.mxu0 0.0
        %635 = vmatpush1.msra.mxu0 0.0
        %636 = vmatprep.subr.mxu0 0.0
        %637 = vmatpush1.msra.mxu0 0.0
        %638 = vmatprep.subr.mxu0 0.0
        %639 = vmatpush1.msra.mxu0 0.0
        %640 = vmatprep.subr.mxu0 0.0
        %641 = vmatpush1.msra.mxu0 0.0
        %642 = vmatprep.subr.mxu0 0.0
        %643 = vmatpush1.msra.mxu0 0.0
        %644 = vmatprep.subr.mxu0 0.0
        %645 = vmatpush1.msra.mxu0 0.0
        %646 = vmatprep.subr.mxu0 0.0
        %647 = vmatpush1.msra.mxu0 0.0
        %648 = vmatprep.subr.mxu0 0.0
        %649 = vmatpush1.msra.mxu0 0.0
        %650 = vmatprep.subr.mxu0 0.0
        %651 = vmatpush1.msra.mxu0 0.0
        %652 = vmatprep.subr.mxu0 0.0
        %653 = vmatpush1.msra.mxu0 0.0
        %654 = vmatprep.subr.mxu0 0.0
        %655 = vmatpush1.msra.mxu0 0.0
        %656 = vmatprep.subr.mxu0 0.0
        %657 = vmatpush1.msra.mxu0 0.0
        %658 = vmatprep.subr.mxu0 0.0
        %659 = vmatpush1.msra.mxu0 0.0
        %660 = vmatprep.subr.mxu0 0.0
        %661 = vmatpush1.msra.mxu0 0.0
        %662 = vmatprep.subr.mxu0 0.0
        %663 = vmatpush1.msra.mxu0 0.0
        %664 = vmatprep.mubr.f32.mxu0 0.0
        %665 = vmatmul.mubr.f32.gmra.mrb[0].mxu0 %v598
        %v666 = vpop.f32.mrb[0].mxu0
        %v667 = vadd.f32 0.0, %v666
        %v668 = vpop.f32.mrb[0].mxu0
        %669 = vdwg.mxu0
        %v670 = vrcp.pop %v596
        %v671 = vmul.f32 %v667, %v670
        %672 = vrot.lane.b32.xlu0 %v500, 120
        %v673 = vpop.permute.xlu0 %672
        %674 = vrot.lane.b32.xlu0 %v503, 120
        %v675 = vpop.permute.xlu0 %674
        %676 = vrot.lane.b32.xlu0 %v504, 120
        %v677 = vpop.permute.xlu0 %676
        %v678 = vsel %vm507, %v673, 0
        %v680 = vsel %vm507, %v675, 0
        %v682 = vsel %vm507, %v677, 0
        %684 = vmatprep.subr.mxu0 0.0
        %685 = vmatpush1.xpose.msra.mxu0 %v680
        %686 = vmatprep.subr.mxu0 0.0
        %687 = vmatpush1.xpose.msra.mxu0 %v682
        %688 = vmatprep.subr.mxu0 0.0
        %689 = vmatpush1.xpose.msra.mxu0 0.0
        %690 = vmatprep.subr.mxu0 0.0
        %691 = vmatpush1.xpose.msra.mxu0 0.0
        %692 = vmatprep.subr.mxu0 0.0
        %693 = vmatpush1.xpose.msra.mxu0 0.0
        %694 = vmatprep.subr.mxu0 0.0
        %695 = vmatpush1.xpose.msra.mxu0 0.0
        %696 = vmatprep.subr.mxu0 0.0
        %697 = vmatpush1.xpose.msra.mxu0 0.0
        %698 = vmatprep.subr.mxu0 0.0
        %699 = vmatpush1.xpose.msra.mxu0 0.0
        %700 = vmatprep.subr.mxu0 0.0
        %701 = vmatpush1.xpose.msra.mxu0 0.0
        %702 = vmatprep.subr.mxu0 0.0
        %703 = vmatpush1.xpose.msra.mxu0 0.0
        %704 = vmatprep.subr.mxu0 0.0
        %705 = vmatpush1.xpose.msra.mxu0 0.0
        %706 = vmatprep.subr.mxu0 0.0
        %707 = vmatpush1.xpose.msra.mxu0 0.0
        %708 = vmatprep.subr.mxu0 0.0
        %709 = vmatpush1.xpose.msra.mxu0 0.0
        %710 = vmatprep.subr.mxu0 0.0
        %711 = vmatpush1.xpose.msra.mxu0 0.0
        %712 = vmatprep.subr.mxu0 0.0
        %713 = vmatpush1.xpose.msra.mxu0 0.0
        %714 = vmatprep.subr.mxu0 0.0
        %715 = vmatpush1.xpose.msra.mxu0 0.0
        %716 = vmatprep.subr.mxu0 0.0
        %717 = vmatpush1.xpose.msra.mxu0 0.0
        %718 = vmatprep.subr.mxu0 0.0
        %719 = vmatpush1.xpose.msra.mxu0 0.0
        %720 = vmatprep.subr.mxu0 0.0
        %721 = vmatpush1.xpose.msra.mxu0 0.0
        %722 = vmatprep.subr.mxu0 0.0
        %723 = vmatpush1.xpose.msra.mxu0 0.0
        %724 = vmatprep.subr.mxu0 0.0
        %725 = vmatpush1.xpose.msra.mxu0 0.0
        %726 = vmatprep.subr.mxu0 0.0
        %727 = vmatpush1.xpose.msra.mxu0 0.0
        %728 = vmatprep.subr.mxu0 0.0
        %729 = vmatpush1.xpose.msra.mxu0 0.0
        %730 = vmatprep.subr.mxu0 0.0
        %731 = vmatpush1.xpose.msra.mxu0 0.0
        %732 = vmatprep.subr.mxu0 0.0
        %733 = vmatpush1.xpose.msra.mxu0 0.0
        %734 = vmatprep.subr.mxu0 0.0
        %735 = vmatpush1.xpose.msra.mxu0 0.0
        %736 = vmatprep.subr.mxu0 0.0
        %737 = vmatpush1.xpose.msra.mxu0 0.0
        %738 = vmatprep.subr.mxu0 0.0
        %739 = vmatpush1.xpose.msra.mxu0 0.0
        %740 = vmatprep.subr.mxu0 0.0
        %741 = vmatpush1.xpose.msra.mxu0 0.0
        %742 = vmatprep.subr.mxu0 0.0
        %743 = vmatpush1.xpose.msra.mxu0 0.0
        %744 = vmatprep.subr.mxu0 0.0
        %745 = vmatpush1.xpose.msra.mxu0 0.0
        %746 = vmatprep.subr.mxu0 0.0
        %747 = vmatpush1.xpose.msra.mxu0 0.0
        %748 = vmatprep.mubr.f32.mxu0 0.0
        %749 = vmatmul.mubr.f32.gmra.mrb[0].mxu0 %v678
        %v750 = vpop.f32.mrb[0].mxu0
        %v751 = vadd.f32 0.0, %v750
        %v752 = vpop.f32.mrb[0].mxu0
        %753 = vdwg.mxu0
        %v754 = vsel %vm587, %v751, -inf
        %755 = vmax.xlane.f32.xlu0 %v754
        %v756 = vpop.xlane.xlu0 %755
        %v757 = vsub.f32 %v751, %v756
        %v758 = vmul.f32 %v757, 1.442695
        %v759 = vpow.pop %v758
        %v760 = vsel %vm587, %v759, 0.0
        %761 = vadd.xlane.f32.xlu0 %v760
        %v762 = vpop.xlane.xlu0 %761
        %765 = vrot.lane.b32.xlu0 %v505, 120
        %v766 = vpop.permute.xlu0 %765
        %767 = vrot.lane.b32.xlu0 %v506, 120
        %v768 = vpop.permute.xlu0 %767
        %v772 = vsel %vm587, %v759, 0
        %774 = vmatprep.subr.mxu0 0.0
        %775 = vmatpush1.msra.mxu0 %v766
        %776 = vmatprep.subr.mxu0 0.0
        %777 = vmatpush1.msra.mxu0 %v768
        %778 = vmatprep.subr.mxu0 0.0
        %779 = vmatpush1.msra.mxu0 0.0
        %780 = vmatprep.subr.mxu0 0.0
        %781 = vmatpush1.msra.mxu0 0.0
        %782 = vmatprep.subr.mxu0 0.0
        %783 = vmatpush1.msra.mxu0 0.0
        %784 = vmatprep.subr.mxu0 0.0
        %785 = vmatpush1.msra.mxu0 0.0
        %786 = vmatprep.subr.mxu0 0.0
        %787 = vmatpush1.msra.mxu0 0.0
        %788 = vmatprep.subr.mxu0 0.0
        %789 = vmatpush1.msra.mxu0 0.0
        %790 = vmatprep.subr.mxu0 0.0
        %791 = vmatpush1.msra.mxu0 0.0
        %792 = vmatprep.subr.mxu0 0.0
        %793 = vmatpush1.msra.mxu0 0.0
        %794 = vmatprep.subr.mxu0 0.0
        %795 = vmatpush1.msra.mxu0 0.0
        %796 = vmatprep.subr.mxu0 0.0
        %797 = vmatpush1.msra.mxu0 0.0
        %798 = vmatprep.subr.mxu0 0.0
        %799 = vmatpush1.msra.mxu0 0.0
        %800 = vmatprep.subr.mxu0 0.0
        %801 = vmatpush1.msra.mxu0 0.0
        %802 = vmatprep.subr.mxu0 0.0
        %803 = vmatpush1.msra.mxu0 0.0
        %804 = vmatprep.subr.mxu0 0.0
        %805 = vmatpush1.msra.mxu0 0.0
        %806 = vmatprep.subr.mxu0 0.0
        %807 = vmatpush1.msra.mxu0 0.0
        %808 = vmatprep.subr.mxu0 0.0
        %809 = vmatpush1.msra.mxu0 0.0
        %810 = vmatprep.subr.mxu0 0.0
        %811 = vmatpush1.msra.mxu0 0.0
        %812 = vmatprep.subr.mxu0 0.0
        %813 = vmatpush1.msra.mxu0 0.0
        %814 = vmatprep.subr.mxu0 0.0
        %815 = vmatpush1.msra.mxu0 0.0
        %816 = vmatprep.subr.mxu0 0.0
        %817 = vmatpush1.msra.mxu0 0.0
        %818 = vmatprep.subr.mxu0 0.0
        %819 = vmatpush1.msra.mxu0 0.0
        %820 = vmatprep.subr.mxu0 0.0
        %821 = vmatpush1.msra.mxu0 0.0
        %822 = vmatprep.subr.mxu0 0.0
        %823 = vmatpush1.msra.mxu0 0.0
        %824 = vmatprep.subr.mxu0 0.0
        %825 = vmatpush1.msra.mxu0 0.0
        %826 = vmatprep.subr.mxu0 0.0
        %827 = vmatpush1.msra.mxu0 0.0
        %828 = vmatprep.subr.mxu0 0.0
        %829 = vmatpush1.msra.mxu0 0.0
        %830 = vmatprep.subr.mxu0 0.0
        %831 = vmatpush1.msra.mxu0 0.0
        %832 = vmatprep.subr.mxu0 0.0
        %833 = vmatpush1.msra.mxu0 0.0
        %834 = vmatprep.subr.mxu0 0.0
        %835 = vmatpush1.msra.mxu0 0.0
        %836 = vmatprep.subr.mxu0 0.0
        %837 = vmatpush1.msra.mxu0 0.0
        %838 = vmatprep.mubr.f32.mxu0 0.0
        %839 = vmatmul.mubr.f32.gmra.mrb[0].mxu0 %v772
        %v840 = vpop.f32.mrb[0].mxu0
        %v841 = vadd.f32 0.0, %v840
        %v842 = vpop.f32.mrb[0].mxu0
        %843 = vdwg.mxu0
        %v844 = vrcp.pop %v762
        %v845 = vmul.f32 %v841, %v844
        %846 = vrot.lane.b32.xlu0 %v500, 112
        %v847 = vpop.permute.xlu0 %846
        %848 = vrot.lane.b32.xlu0 %v503, 112
        %v849 = vpop.permute.xlu0 %848
        %850 = vrot.lane.b32.xlu0 %v504, 112
        %v851 = vpop.permute.xlu0 %850
        %v852 = vsel %vm507, %v847, 0
        %v854 = vsel %vm507, %v849, 0
        %v856 = vsel %vm507, %v851, 0
        %858 = vmatprep.subr.mxu0 0.0
        %859 = vmatpush1.xpose.msra.mxu0 %v854
        %860 = vmatprep.subr.mxu0 0.0
        %861 = vmatpush1.xpose.msra.mxu0 %v856
        %862 = vmatprep.subr.mxu0 0.0
        %863 = vmatpush1.xpose.msra.mxu0 0.0
        %864 = vmatprep.subr.mxu0 0.0
        %865 = vmatpush1.xpose.msra.mxu0 0.0
        %866 = vmatprep.subr.mxu0 0.0
        %867 = vmatpush1.xpose.msra.mxu0 0.0
        %868 = vmatprep.subr.mxu0 0.0
        %869 = vmatpush1.xpose.msra.mxu0 0.0
        %870 = vmatprep.subr.mxu0 0.0
        %871 = vmatpush1.xpose.msra.mxu0 0.0
        %872 = vmatprep.subr.mxu0 0.0
        %873 = vmatpush1.xpose.msra.mxu0 0.0
        %874 = vmatprep.subr.mxu0 0.0
        %875 = vmatpush1.xpose.msra.mxu0 0.0
        %876 = vmatprep.subr.mxu0 0.0
        %877 = vmatpush1.xpose.msra.mxu0 0.0
        %878 = vmatprep.subr.mxu0 0.0
        %879 = vmatpush1.xpose.msra.mxu0 0.0
        %880 = vmatprep.subr.mxu0 0.0
        %881 = vmatpush1.xpose.msra.mxu0 0.0
        %882 = vmatprep.subr.mxu0 0.0
        %883 = vmatpush1.xpose.msra.mxu0 0.0
        %884 = vmatprep.subr.mxu0 0.0
        %885 = vmatpush1.xpose.msra.mxu0 0.0
        %886 = vmatprep.subr.mxu0 0.0
        %887 = vmatpush1.xpose.msra.mxu0 0.0
        %888 = vmatprep.subr.mxu0 0.0
        %889 = vmatpush1.xpose.msra.mxu0 0.0
        %890 = vmatprep.subr.mxu0 0.0
        %891 = vmatpush1.xpose.msra.mxu0 0.0
        %892 = vmatprep.subr.mxu0 0.0
        %893 = vmatpush1.xpose.msra.mxu0 0.0
        %894 = vmatprep.subr.mxu0 0.0
        %895 = vmatpush1.xpose.msra.mxu0 0.0
        %896 = vmatprep.subr.mxu0 0.0
        %897 = vmatpush1.xpose.msra.mxu0 0.0
        %898 = vmatprep.subr.mxu0 0.0
        %899 = vmatpush1.xpose.msra.mxu0 0.0
        %900 = vmatprep.subr.mxu0 0.0
        %901 = vmatpush1.xpose.msra.mxu0 0.0
        %902 = vmatprep.subr.mxu0 0.0
        %903 = vmatpush1.xpose.msra.mxu0 0.0
        %904 = vmatprep.subr.mxu0 0.0
        %905 = vmatpush1.xpose.msra.mxu0 0.0
        %906 = vmatprep.subr.mxu0 0.0
        %907 = vmatpush1.xpose.msra.mxu0 0.0
        %908 = vmatprep.subr.mxu0 0.0
        %909 = vmatpush1.xpose.msra.mxu0 0.0
        %910 = vmatprep.subr.mxu0 0.0
        %911 = vmatpush1.xpose.msra.mxu0 0.0
        %912 = vmatprep.subr.mxu0 0.0
        %913 = vmatpush1.xpose.msra.mxu0 0.0
        %914 = vmatprep.subr.mxu0 0.0
        %915 = vmatpush1.xpose.msra.mxu0 0.0
        %916 = vmatprep.subr.mxu0 0.0
        %917 = vmatpush1.xpose.msra.mxu0 0.0
        %918 = vmatprep.subr.mxu0 0.0
        %919 = vmatpush1.xpose.msra.mxu0 0.0
        %920 = vmatprep.subr.mxu0 0.0
        %921 = vmatpush1.xpose.msra.mxu0 0.0
        %922 = vmatprep.mubr.f32.mxu0 0.0
        %923 = vmatmul.mubr.f32.gmra.mrb[0].mxu0 %v852
        %v924 = vpop.f32.mrb[0].mxu0
        %v925 = vadd.f32 0.0, %v924
        %v926 = vpop.f32.mrb[0].mxu0
        %927 = vdwg.mxu0
        %v928 = vsel %vm587, %v925, -inf
        %929 = vmax.xlane.f32.xlu0 %v928
        %v930 = vpop.xlane.xlu0 %929
        %v931 = vsub.f32 %v925, %v930
        %v932 = vmul.f32 %v931, 1.442695
        %v933 = vpow.pop %v932
        %v934 = vsel %vm587, %v933, 0.0
        %935 = vadd.xlane.f32.xlu0 %v934
        %v936 = vpop.xlane.xlu0 %935
        %937 = vrot.lane.b32.xlu0 %v505, 112
        %v938 = vpop.permute.xlu0 %937
        %939 = vrot.lane.b32.xlu0 %v506, 112
        %v940 = vpop.permute.xlu0 %939
        %v944 = vsel %vm587, %v933, 0
        %946 = vmatprep.subr.mxu0 0.0
        %947 = vmatpush1.msra.mxu0 %v938
        %948 = vmatprep.subr.mxu0 0.0
        %949 = vmatpush1.msra.mxu0 %v940
        %950 = vmatprep.subr.mxu0 0.0
        %951 = vmatpush1.msra.mxu0 0.0
        %952 = vmatprep.subr.mxu0 0.0
        %953 = vmatpush1.msra.mxu0 0.0
        %954 = vmatprep.subr.mxu0 0.0
        %955 = vmatpush1.msra.mxu0 0.0
        %956 = vmatprep.subr.mxu0 0.0
        %957 = vmatpush1.msra.mxu0 0.0
        %958 = vmatprep.subr.mxu0 0.0
        %959 = vmatpush1.msra.mxu0 0.0
        %960 = vmatprep.subr.mxu0 0.0
        %961 = vmatpush1.msra.mxu0 0.0
        %962 = vmatprep.subr.mxu0 0.0
        %963 = vmatpush1.msra.mxu0 0.0
        %964 = vmatprep.subr.mxu0 0.0
        %965 = vmatpush1.msra.mxu0 0.0
        %966 = vmatprep.subr.mxu0 0.0
        %967 = vmatpush1.msra.mxu0 0.0
        %968 = vmatprep.subr.mxu0 0.0
        %969 = vmatpush1.msra.mxu0 0.0
        %970 = vmatprep.subr.mxu0 0.0
        %971 = vmatpush1.msra.mxu0 0.0
        %972 = vmatprep.subr.mxu0 0.0
        %973 = vmatpush1.msra.mxu0 0.0
        %974 = vmatprep.subr.mxu0 0.0
        %975 = vmatpush1.msra.mxu0 0.0
        %976 = vmatprep.subr.mxu0 0.0
        %977 = vmatpush1.msra.mxu0 0.0
        %978 = vmatprep.subr.mxu0 0.0
        %979 = vmatpush1.msra.mxu0 0.0
        %980 = vmatprep.subr.mxu0 0.0
        %981 = vmatpush1.msra.mxu0 0.0
        %982 = vmatprep.subr.mxu0 0.0
        %983 = vmatpush1.msra.mxu0 0.0
        %984 = vmatprep.subr.mxu0 0.0
        %985 = vmatpush1.msra.mxu0 0.0
        %986 = vmatprep.subr.mxu0 0.0
        %987 = vmatpush1.msra.mxu0 0.0
        %988 = vmatprep.subr.mxu0 0.0
        %989 = vmatpush1.msra.mxu0 0.0
        %990 = vmatprep.subr.mxu0 0.0
        %991 = vmatpush1.msra.mxu0 0.0
        %992 = vmatprep.subr.mxu0 0.0
        %993 = vmatpush1.msra.mxu0 0.0
        %994 = vmatprep.subr.mxu0 0.0
        %995 = vmatpush1.msra.mxu0 0.0
        %996 = vmatprep.subr.mxu0 0.0
        %997 = vmatpush1.msra.mxu0 0.0
        %998 = vmatprep.subr.mxu0 0.0
        %999 = vmatpush1.msra.mxu0 0.0
        %1000 = vmatprep.subr.mxu0 0.0
        %1001 = vmatpush1.msra.mxu0 0.0
        %1002 = vmatprep.subr.mxu0 0.0
        %1003 = vmatpush1.msra.mxu0 0.0
        %1004 = vmatprep.subr.mxu0 0.0
        %1005 = vmatpush1.msra.mxu0 0.0
        %1006 = vmatprep.subr.mxu0 0.0
        %1007 = vmatpush1.msra.mxu0 0.0
        %1008 = vmatprep.subr.mxu0 0.0
        %1009 = vmatpush1.msra.mxu0 0.0
        %1010 = vmatprep.mubr.f32.mxu0 0.0
        %1011 = vmatmul.mubr.f32.gmra.mrb[0].mxu0 %v944
        %v1012 = vpop.f32.mrb[0].mxu0
        %v1013 = vadd.f32 0.0, %v1012
        %v1014 = vpop.f32.mrb[0].mxu0
        %1015 = vdwg.mxu0
        %v1016 = vrcp.pop %v936
        %v1017 = vmul.f32 %v1013, %v1016
        %1018 = vrot.lane.b32.xlu0 %v500, 104
        %v1019 = vpop.permute.xlu0 %1018
        %1020 = vrot.lane.b32.xlu0 %v503, 104
        %v1021 = vpop.permute.xlu0 %1020
        %1022 = vrot.lane.b32.xlu0 %v504, 104
        %v1023 = vpop.permute.xlu0 %1022
        %v1024 = vsel %vm507, %v1019, 0
        %v1026 = vsel %vm507, %v1021, 0
        %v1028 = vsel %vm507, %v1023, 0
        %1030 = vmatprep.subr.mxu0 0.0
        %1031 = vmatpush1.xpose.msra.mxu0 %v1026
        %1032 = vmatprep.subr.mxu0 0.0
        %1033 = vmatpush1.xpose.msra.mxu0 %v1028
        %1034 = vmatprep.subr.mxu0 0.0
        %1035 = vmatpush1.xpose.msra.mxu0 0.0
        %1036 = vmatprep.subr.mxu0 0.0
        %1037 = vmatpush1.xpose.msra.mxu0 0.0
        %1038 = vmatprep.subr.mxu0 0.0
        %1039 = vmatpush1.xpose.msra.mxu0 0.0
        %1040 = vmatprep.subr.mxu0 0.0
        %1041 = vmatpush1.xpose.msra.mxu0 0.0
        %1042 = vmatprep.subr.mxu0 0.0
        %1043 = vmatpush1.xpose.msra.mxu0 0.0
        %1044 = vmatprep.subr.mxu0 0.0
        %1045 = vmatpush1.xpose.msra.mxu0 0.0
        %1046 = vmatprep.subr.mxu0 0.0
        %1047 = vmatpush1.xpose.msra.mxu0 0.0
        %1048 = vmatprep.subr.mxu0 0.0
        %1049 = vmatpush1.xpose.msra.mxu0 0.0
        %1050 = vmatprep.subr.mxu0 0.0
        %1051 = vmatpush1.xpose.msra.mxu0 0.0
        %1052 = vmatprep.subr.mxu0 0.0
        %1053 = vmatpush1.xpose.msra.mxu0 0.0
        %1054 = vmatprep.subr.mxu0 0.0
        %1055 = vmatpush1.xpose.msra.mxu0 0.0
        %1056 = vmatprep.subr.mxu0 0.0
        %1057 = vmatpush1.xpose.msra.mxu0 0.0
        %1058 = vmatprep.subr.mxu0 0.0
        %1059 = vmatpush1.xpose.msra.mxu0 0.0
        %1060 = vmatprep.subr.mxu0 0.0
        %1061 = vmatpush1.xpose.msra.mxu0 0.0
        %1062 = vmatprep.subr.mxu0 0.0
        %1063 = vmatpush1.xpose.msra.mxu0 0.0
        %1064 = vmatprep.subr.mxu0 0.0
        %1065 = vmatpush1.xpose.msra.mxu0 0.0
        %1066 = vmatprep.subr.mxu0 0.0
        %1067 = vmatpush1.xpose.msra.mxu0 0.0
        %1068 = vmatprep.subr.mxu0 0.0
        %1069 = vmatpush1.xpose.msra.mxu0 0.0
        %1070 = vmatprep.subr.mxu0 0.0
        %1071 = vmatpush1.xpose.msra.mxu0 0.0
        %1072 = vmatprep.subr.mxu0 0.0
        %1073 = vmatpush1.xpose.msra.mxu0 0.0
        %1074 = vmatprep.subr.mxu0 0.0
        %1075 = vmatpush1.xpose.msra.mxu0 0.0
        %1076 = vmatprep.subr.mxu0 0.0
        %1077 = vmatpush1.xpose.msra.mxu0 0.0
        %1078 = vmatprep.subr.mxu0 0.0
        %1079 = vmatpush1.xpose.msra.mxu0 0.0
        %1080 = vmatprep.subr.mxu0 0.0
        %1081 = vmatpush1.xpose.msra.mxu0 0.0
        %1082 = vmatprep.subr.mxu0 0.0
        %1083 = vmatpush1.xpose.msra.mxu0 0.0
        %1084 = vmatprep.subr.mxu0 0.0
        %1085 = vmatpush1.xpose.msra.mxu0 0.0
        %1086 = vmatprep.subr.mxu0 0.0
        %1087 = vmatpush1.xpose.msra.mxu0 0.0
        %1088 = vmatprep.subr.mxu0 0.0
        %1089 = vmatpush1.xpose.msra.mxu0 0.0
        %1090 = vmatprep.subr.mxu0 0.0
        %1091 = vmatpush1.xpose.msra.mxu0 0.0
        %1092 = vmatprep.subr.mxu0 0.0
        %1093 = vmatpush1.xpose.msra.mxu0 0.0
        %1094 = vmatprep.mubr.f32.mxu0 0.0
        %1095 = vmatmul.mubr.f32.gmra.mrb[0].mxu0 %v1024
        %v1096 = vpop.f32.mrb[0].mxu0
        %v1097 = vadd.f32 0.0, %v1096
        %v1098 = vpop.f32.mrb[0].mxu0
        %1099 = vdwg.mxu0
        %v1100 = vsel %vm587, %v1097, -inf
        %1101 = vmax.xlane.f32.xlu0 %v1100
        %v1102 = vpop.xlane.xlu0 %1101
        %v1103 = vsub.f32 %v1097, %v1102
        %v1104 = vmul.f32 %v1103, 1.442695
        %v1105 = vpow.pop %v1104
        %v1106 = vsel %vm587, %v1105, 0.0
        %1107 = vadd.xlane.f32.xlu0 %v1106
        %v1108 = vpop.xlane.xlu0 %1107
        %1109 = vrot.lane.b32.xlu0 %v505, 104
        %v1110 = vpop.permute.xlu0 %1109
        %1111 = vrot.lane.b32.xlu0 %v506, 104
        %v1112 = vpop.permute.xlu0 %1111
        %v1116 = vsel %vm587, %v1105, 0
        %1118 = vmatprep.subr.mxu0 0.0
        %1119 = vmatpush1.msra.mxu0 %v1110
        %1120 = vmatprep.subr.mxu0 0.0
        %1121 = vmatpush1.msra.mxu0 %v1112
        %1122 = vmatprep.subr.mxu0 0.0
        %1123 = vmatpush1.msra.mxu0 0.0
        %1124 = vmatprep.subr.mxu0 0.0
        %1125 = vmatpush1.msra.mxu0 0.0
        %1126 = vmatprep.subr.mxu0 0.0
        %1127 = vmatpush1.msra.mxu0 0.0
        %1128 = vmatprep.subr.mxu0 0.0
        %1129 = vmatpush1.msra.mxu0 0.0
        %1130 = vmatprep.subr.mxu0 0.0
        %1131 = vmatpush1.msra.mxu0 0.0
        %1132 = vmatprep.subr.mxu0 0.0
        %1133 = vmatpush1.msra.mxu0 0.0
        %1134 = vmatprep.subr.mxu0 0.0
        %1135 = vmatpush1.msra.mxu0 0.0
        %1136 = vmatprep.subr.mxu0 0.0
        %1137 = vmatpush1.msra.mxu0 0.0
        %1138 = vmatprep.subr.mxu0 0.0
        %1139 = vmatpush1.msra.mxu0 0.0
        %1140 = vmatprep.subr.mxu0 0.0
        %1141 = vmatpush1.msra.mxu0 0.0
        %1142 = vmatprep.subr.mxu0 0.0
        %1143 = vmatpush1.msra.mxu0 0.0
        %1144 = vmatprep.subr.mxu0 0.0
        %1145 = vmatpush1.msra.mxu0 0.0
        %1146 = vmatprep.subr.mxu0 0.0
        %1147 = vmatpush1.msra.mxu0 0.0
        %1148 = vmatprep.subr.mxu0 0.0
        %1149 = vmatpush1.msra.mxu0 0.0
        %1150 = vmatprep.subr.mxu0 0.0
        %1151 = vmatpush1.msra.mxu0 0.0
        %1152 = vmatprep.subr.mxu0 0.0
        %1153 = vmatpush1.msra.mxu0 0.0
        %1154 = vmatprep.subr.mxu0 0.0
        %1155 = vmatpush1.msra.mxu0 0.0
        %1156 = vmatprep.subr.mxu0 0.0
        %1157 = vmatpush1.msra.mxu0 0.0
        %1158 = vmatprep.subr.mxu0 0.0
        %1159 = vmatpush1.msra.mxu0 0.0
        %1160 = vmatprep.subr.mxu0 0.0
        %1161 = vmatpush1.msra.mxu0 0.0
        %1162 = vmatprep.subr.mxu0 0.0
        %1163 = vmatpush1.msra.mxu0 0.0
        %1164 = vmatprep.subr.mxu0 0.0
        %1165 = vmatpush1.msra.mxu0 0.0
        %1166 = vmatprep.subr.mxu0 0.0
        %1167 = vmatpush1.msra.mxu0 0.0
        %1168 = vmatprep.subr.mxu0 0.0
        %1169 = vmatpush1.msra.mxu0 0.0
        %1170 = vmatprep.subr.mxu0 0.0
        %1171 = vmatpush1.msra.mxu0 0.0
        %1172 = vmatprep.subr.mxu0 0.0
        %1173 = vmatpush1.msra.mxu0 0.0
        %1174 = vmatprep.subr.mxu0 0.0
        %1175 = vmatpush1.msra.mxu0 0.0
        %1176 = vmatprep.subr.mxu0 0.0
        %1177 = vmatpush1.msra.mxu0 0.0
        %1178 = vmatprep.subr.mxu0 0.0
        %1179 = vmatpush1.msra.mxu0 0.0
        %1180 = vmatprep.subr.mxu0 0.0
        %1181 = vmatpush1.msra.mxu0 0.0
        %1182 = vmatprep.mubr.f32.mxu0 0.0
        %1183 = vmatmul.mubr.f32.gmra.mrb[0].mxu0 %v1116
        %v1184 = vpop.f32.mrb[0].mxu0
        %v1185 = vadd.f32 0.0, %v1184
        %v1186 = vpop.f32.mrb[0].mxu0
        %1187 = vdwg.mxu0
        %v1188 = vrcp.pop %v1108
        %v1189 = vmul.f32 %v1185, %v1188
        %1191 = vrot.lane.b32.xlu0 %v845, 8
        %v1192 = vpop.permute.xlu0 %1191
        %1195 = vrot.lane.b32.xlu0 %v1017, 16
        %v1196 = vpop.permute.xlu0 %1195
        %1199 = vrot.lane.b32.xlu0 %v1189, 24
        %v1200 = vpop.permute.xlu0 %1199
        %v1202 = vsel %vm507, %v671, %v1192
        %v1203 = vsel %vm587, %v1202, %v1196
        %vm1204 = vcmask 195584
        %v1205 = vsel %vm1204, %v1203, %v1200
        %v1206 = vld [vmem:[#allocation3] sm:$0xff]
        %v1207 = vld [vmem:[%s398] sm:$0xff]
        %v1208 = vld [vmem:[%s398 + $0x8] sm:$0xff]
        %v1209 = vld [vmem:[%s398 + $0x10] sm:$0xff]
        %v1210 = vld [vmem:[%s398 + $0x18] sm:$0xff]
        %v1212 = vsel %vm429, %v1205, 0
        %1214 = vmatprep.subr.mxu0 0.0
        %1215 = vmatpush1.msra.mxu0 %v1207
        %1216 = vmatprep.subr.mxu0 0.0
        %1217 = vmatpush1.msra.mxu0 %v1208
        %1218 = vmatprep.subr.mxu0 0.0
        %1219 = vmatpush1.msra.mxu0 %v1209
        %1220 = vmatprep.subr.mxu0 0.0
        %1221 = vmatpush1.msra.mxu0 %v1210
        %1222 = vmatprep.subr.mxu0 0.0
        %1223 = vmatpush1.msra.mxu0 0.0
        %1224 = vmatprep.subr.mxu0 0.0
        %1225 = vmatpush1.msra.mxu0 0.0
        %1226 = vmatprep.subr.mxu0 0.0
        %1227 = vmatpush1.msra.mxu0 0.0
        %1228 = vmatprep.subr.mxu0 0.0
        %1229 = vmatpush1.msra.mxu0 0.0
        %1230 = vmatprep.subr.mxu0 0.0
        %1231 = vmatpush1.msra.mxu0 0.0
        %1232 = vmatprep.subr.mxu0 0.0
        %1233 = vmatpush1.msra.mxu0 0.0
        %1234 = vmatprep.subr.mxu0 0.0
        %1235 = vmatpush1.msra.mxu0 0.0
        %1236 = vmatprep.subr.mxu0 0.0
        %1237 = vmatpush1.msra.mxu0 0.0
        %1238 = vmatprep.subr.mxu0 0.0
        %1239 = vmatpush1.msra.mxu0 0.0
        %1240 = vmatprep.subr.mxu0 0.0
        %1241 = vmatpush1.msra.mxu0 0.0
        %1242 = vmatprep.subr.mxu0 0.0
        %1243 = vmatpush1.msra.mxu0 0.0
        %1244 = vmatprep.subr.mxu0 0.0
        %1245 = vmatpush1.msra.mxu0 0.0
        %1246 = vmatprep.subr.mxu0 0.0
        %1247 = vmatpush1.msra.mxu0 0.0
        %1248 = vmatprep.subr.mxu0 0.0
        %1249 = vmatpush1.msra.mxu0 0.0
        %1250 = vmatprep.subr.mxu0 0.0
        %1251 = vmatpush1.msra.mxu0 0.0
        %1252 = vmatprep.subr.mxu0 0.0
        %1253 = vmatpush1.msra.mxu0 0.0
        %1254 = vmatprep.subr.mxu0 0.0
        %1255 = vmatpush1.msra.mxu0 0.0
        %1256 = vmatprep.subr.mxu0 0.0
        %1257 = vmatpush1.msra.mxu0 0.0
        %1258 = vmatprep.subr.mxu0 0.0
        %1259 = vmatpush1.msra.mxu0 0.0
        %1260 = vmatprep.subr.mxu0 0.0
        %1261 = vmatpush1.msra.mxu0 0.0
        %1262 = vmatprep.subr.mxu0 0.0
        %1263 = vmatpush1.msra.mxu0 0.0
        %1264 = vmatprep.subr.mxu0 0.0
        %1265 = vmatpush1.msra.mxu0 0.0
        %1266 = vmatprep.subr.mxu0 0.0
        %1267 = vmatpush1.msra.mxu0 0.0
        %1268 = vmatprep.subr.mxu0 0.0
        %1269 = vmatpush1.msra.mxu0 0.0
        %1270 = vmatprep.subr.mxu0 0.0
        %1271 = vmatpush1.msra.mxu0 0.0
        %1272 = vmatprep.subr.mxu0 0.0
        %1273 = vmatpush1.msra.mxu0 0.0
        %1274 = vmatprep.subr.mxu0 0.0
        %1275 = vmatpush1.msra.mxu0 0.0
        %1276 = vmatprep.subr.mxu0 0.0
        %1277 = vmatpush1.msra.mxu0 0.0
        %1278 = vmatprep.mubr.f32.mxu0 0.0
        %1279 = vmatmul.mubr.f32.gmra.mrb[0].mxu0 %v1212
        %v1280 = vpop.f32.mrb[0].mxu0
        %v1281 = vadd.f32 0.0, %v1280
        %v1282 = vpop.f32.mrb[0].mxu0
        %1283 = vdwg.mxu0
        %v1284 = vadd.f32 %v1206, %v1281
        %1285 = vst.msk [vmem:[#allocation3] sm:$0xff] %vm429, %v1284
        // Predicated region
        $region53: #{t5_layer_cross_attention.3} parent=43 // pred_check
          %p1286 = pneg %p399
        $region54: #{t5_layer_cross_attention.3} parent=43 // pred_check_branch
          %1288 = sbr.rel (%p1286) target = $region56
        $region55: #{t5_layer_cross_attention.3} parent=43 // pred_region
          %v1289 = vld [vmem:[#allocation3] sm:$0xff]
          %1290 = vst.msk [vmem:[%s370] sm:$0xff] %vm429, %v1289
        $region56: #{t5_layer_cross_attention.3} parent=43 // pred_fallthru
          _
        %s1291 = sand.u32 %s209, 1
        %s1292 = scalar_lea.sflag [#allocation6], %s1291
        %s1293 = sand.u32 %s209, 1
        %s1294 = smul.addr %s1293, 8
        %s1295 = scalar_lea.vmem [#allocation7], %s1294
        // Predicated region
        $region57: #{t5_layer_cross_attention.3} parent=43 // pred_check
          %p1296 = pneg %p219
        $region58: #{t5_layer_cross_attention.3} parent=43 // pred_check_branch
          %1298 = sbr.rel (%p1296) target = $region60
        $region59: #{t5_layer_cross_attention.3} parent=43 // pred_region
          %s1300 = ssub.s32 128, 128
          %1301 = vsyncadd %s1292, %s1300
          %s1302 = sadd.s32 %s29, %s28
          %s1303 = smul.addr %s1302, 128
          %s1304 = scalar_lea.hbm %s6, %s1303
          %s1306 = sshll.u32 %s1295, 4
          %s1307 = int_to_ptr.vmem [resolvable:$true] %s1306
          %1309 = dma.vmem_to_hbm [thread:$0]  %s1307, 128, %s1304, %s1292
        $region60: #{t5_layer_cross_attention.3} parent=43 // pred_fallthru
          _
      $region44: #{t5_layer_cross_attention.3} parent=5 // pred_fallthru
        _
      %p1310 = scmp.le.s32.totalorder 2, %s18
      // Predicated region
      $region61: #{t5_layer_cross_attention.3} parent=5 // pred_check
        %p1311 = pneg %p1310
      $region62: #{t5_layer_cross_attention.3} parent=5 // pred_check_branch
        %1313 = sbr.rel (%p1311) target = $region64
      $region63: #{t5_layer_cross_attention.3} parent=5 // pred_region
        %s1314 = ssub.s32 %s18, 2
        // Predicated region
        $region65: #{t5_layer_cross_attention.3} parent=63 // pred_check
          %p1315 = pneg %p225
        $region66: #{t5_layer_cross_attention.3} parent=63 // pred_check_branch
          %1317 = sbr.rel (%p1315) target = $region68
        $region67: #{t5_layer_cross_attention.3} parent=63 // pred_region
          %s1318 = sand.u32 %s210, 1
          %s1319 = scalar_lea.sflag [#allocation6], %s1318
          %s1320 = sand.u32 %s210, 1
          %s1321 = smul.addr %s1320, 8
          %s1322 = scalar_lea.vmem [#allocation7], %s1321
          %1323 = dma.done %s1319, 128
        $region68: #{t5_layer_cross_attention.3} parent=63 // pred_fallthru
          _
      $region64: #{t5_layer_cross_attention.3} parent=5 // pred_fallthru
        _
    $region6: #{t5_layer_cross_attention.3} parent=1 // loop_footer
      %s22 = sadd.s32 1, %s18
    $region7: #{t5_layer_cross_attention.3} parent=1 // loop_footer_branch
      %17 = sbr.rel target = $region3
    $region8: #{t5_layer_cross_attention.3} parent=1 // loop_exit
      _
    %1324 = vsyncpa [#allocation5], 1
    %s1325 = scalar_lea.sflag [#allocation5], 1
    %1326 = vsyncpa %s1325, 1
    %1327 = vsyncpa [#allocation6], 1
    %s1328 = scalar_lea.sflag [#allocation6], 1
    %1329 = vsyncpa %s1328, 1

</llo_original>
